<compile_context>
chip_gen: v5e
topology: v5e:2x2
jax: 0.10.0
libtpu: 0.0.40
codegen_flags: <defaults>
</compile_context>

<pallas_src>
import functools

import jax
import jax.numpy as jnp
from jax import lax
from jax.experimental import pallas as pl
from jax.experimental.pallas import tpu as pltpu

EPS = 1e-5                         # torch.nn.BatchNorm2d default eps
LANE = 128                         # TPU lane width
VMEM_LIMIT_BYTES = 48 * 1024 * 1024
TARGET_TILE_BYTES = 4 * 1024 * 1024  # f32 bytes per BN-apply input tile


def _round_up(x, m):
    return (x + m - 1) // m * m


def _largest_divisor_leq(n, cap):
    cap = max(1, min(n, cap))
    for d in range(cap, 0, -1):
        if n % d == 0:
            return d
    return 1


# --------------------------------------------------------------------------------------
# In-kernel sub-pixel patch matmul: the 2x2 stride-1 patches of one window row are built
# from the two input rows resident in VMEM; the conv is 4 accumulated MXU dots against
# the per-tap weight slabs (no im2col materialisation anywhere).
# --------------------------------------------------------------------------------------
def _patch_dots(top_ref, bot_ref, w_ref):
    t_w = top_ref.shape[2] - 1
    top = top_ref[0, 0]                      # (Wp, Ci) bf16
    bot = bot_ref[0, 0]                      # (Wp, Ci) bf16
    acc = jnp.dot(top[0:t_w, :], w_ref[0], preferred_element_type=jnp.float32)
    acc = acc + jnp.dot(top[1:t_w + 1, :], w_ref[1], preferred_element_type=jnp.float32)
    acc = acc + jnp.dot(bot[0:t_w, :], w_ref[2], preferred_element_type=jnp.float32)
    acc = acc + jnp.dot(bot[1:t_w + 1, :], w_ref[3], preferred_element_type=jnp.float32)
    return acc                               # (T_w, Npad) f32


# Kernel 1: deconv GEMM + bias + masked per-column (sum, sum_sq) accumulation (BN layers).
# Grid (N, T_h): axis 0 "parallel" (megacore shards images, per-image stats slabs are
# disjoint), axis 1 "arbitrary" (stats accumulate across window rows of one image).
def _deconv_bn_stats_kernel(q_h, q_w, top_ref, bot_ref, w_ref, b_ref, colmeta_ref,
                            y_ref, stats_ref):
    @pl.when(pl.program_id(1) == 0)
    def _():
        stats_ref[...] = jnp.zeros_like(stats_ref)

    acc = _patch_dots(top_ref, bot_ref, w_ref) + b_ref[...]       # (T_w, Npad) f32
    y_ref[0, 0] = acc

    # Validity mask: entry (t_w, col) is a real conv output iff the window position minus
    # the column's parity offset lands inside the output grid.  Lane-padding columns carry
    # off = +BIG so they never validate; batch statistics stay exactly over N*Ho*Wo.
    t_w, npad = acc.shape
    t_h = pl.program_id(1)
    off_h = colmeta_ref[0:1, :]                                    # (1, Npad) int32
    off_w = colmeta_ref[1:2, :]
    qh = t_h - off_h                                               # (1, Npad)
    qw = lax.broadcasted_iota(jnp.int32, (t_w, npad), 0) - off_w   # (T_w, Npad)
    valid = (qh >= 0) & (qh < q_h) & (qw >= 0) & (qw < q_w)
    m = acc * valid.astype(jnp.float32)
    stats_ref[0, 0:1, :] = stats_ref[0, 0:1, :] + jnp.sum(m, axis=0, keepdims=True)
    stats_ref[0, 1:2, :] = stats_ref[0, 1:2, :] + jnp.sum(m * acc, axis=0, keepdims=True)


# Kernel 2: BatchNorm affine (scale/shift) + ReLU, bf16 store.  "parallel" over row tiles.
def _bn_relu_kernel(y_ref, scale_ref, shift_ref, o_ref):
    o_ref[...] = jnp.maximum(y_ref[...] * scale_ref[...] + shift_ref[...],
                             0.0).astype(o_ref.dtype)


# Kernel 3: deconv GEMM + bias + tanh for the output layer.
def _deconv_tanh_kernel(top_ref, bot_ref, w_ref, b_ref, y_ref):
    acc = _patch_dots(top_ref, bot_ref, w_ref) + b_ref[...]
    y_ref[0, 0] = jnp.tanh(acc)


# --------------------------------------------------------------------------------------
# One-time parameter packing (hoisted out of the per-call forward).
# --------------------------------------------------------------------------------------
def _pack_subpixel_weight(w_pt, padding):
    """(Ci, Co, 4, 4) ConvTranspose2d weight -> (4*Ci, 4*Co) sub-pixel GEMM weight."""
    def kidx(r, d):
        return 2 + (r + padding) % 2 - 2 * d

    rows = []
    for dh in (0, 1):
        for dw in (0, 1):
            blocks = [w_pt[:, :, kidx(rh, dh), kidx(rw, dw)]
                      for rh in (0, 1) for rw in (0, 1)]
            rows.append(jnp.concatenate(blocks, axis=1))           # (Ci, 4*Co)
    return jnp.concatenate(rows, axis=0)                           # (4*Ci, 4*Co)


def pack_generator_params(params):
    """Pre-pack weights/bias/parity metadata: sub-pixel reorder, lane pad, bf16 cast."""
    arrays, metas = [], []
    n = len(params)
    for i, (w, b) in enumerate(params):
        assert w.shape[2] == 4 and w.shape[3] == 4, "specialised to k=4, s=2, p in {0,1}"
        padding = 0 if i == 0 else 1
        Ci, Co = int(w.shape[0]), int(w.shape[1])
        Nc = 4 * Co
        Npad = _round_up(Nc, LANE)                                 # lane-dense output width
        w2d = _pack_subpixel_weight(w, padding)                    # (4*Ci, Nc)
        w3d = jnp.pad(w2d.reshape(4, Ci, Nc),
                      ((0, 0), (0, 0), (0, Npad - Nc))).astype(jnp.bfloat16)
        b_packed = jnp.pad(jnp.tile(b, 4),
                           (0, Npad - Nc)).reshape(1, Npad).astype(jnp.float32)
        pr = jnp.arange(Nc) // Co
        if padding == 1:
            off_h, off_w = pr // 2, pr % 2
        else:
            off_h, off_w = jnp.zeros_like(pr), jnp.zeros_like(pr)
        colmeta = jnp.stack([off_h, off_w], axis=0).astype(jnp.int32)
        colmeta = jnp.pad(colmeta, ((0, 0), (0, Npad - Nc)), constant_values=10 ** 6)
        arrays.append(dict(w=w3d, b=b_packed, colmeta=colmeta))
        metas.append(dict(padding=padding, co=Co,
                          mode="tanh" if i == n - 1 else "bn_relu"))
    return arrays, tuple(metas)


def _pixel_shuffle(sub, padding):
    """(N, T_h, T_w, 2, 2, Co) per-parity values -> (N, Ho, Wo, Co) interleaved output."""
    N, T_h, T_w, _, _, Co = sub.shape
    if padding == 1:
        Qh, Qw, offs = T_h - 1, T_w - 1, (0, 1)
    else:
        Qh, Qw, offs = T_h, T_w, (0, 0)
    rows = jnp.stack([sub[:, offs[r]:offs[r] + Qh, :, r, :, :] for r in (0, 1)], axis=2)
    cols = jnp.stack([rows[:, :, :, offs[c]:offs[c] + Qw, c, :] for c in (0, 1)], axis=4)
    return cols.reshape(N, 2 * Qh, 2 * Qw, Co)


# --------------------------------------------------------------------------------------
# One layer: ConvTranspose2d(k=4, s=2, p=padding) [+ BatchNorm2d(train) + ReLU | + Tanh].
# --------------------------------------------------------------------------------------
def deconv_layer(x, arrs, meta):
    N, H, W, Ci = x.shape
    padding, Co, mode = meta["padding"], meta["co"], meta["mode"]
    Nc = 4 * Co
    Npad = arrs["w"].shape[-1]
    T_h, T_w, Wp = H + 1, W + 1, W + 2
    if padding == 1:
        Qh, Qw = T_h - 1, T_w - 1
    else:
        Qh, Qw = T_h, T_w
    Ho, Wo = 2 * Qh, 2 * Qw

    xp = jnp.pad(x, ((0, 0), (1, 1), (1, 1), (0, 0)))              # bf16, halo of zeros

    # Two shifted views of the same padded activation deliver the overlapping row pair.
    top_spec = pl.BlockSpec((1, 1, Wp, Ci), lambda n, t: (n, t, 0, 0))
    bot_spec = pl.BlockSpec((1, 1, Wp, Ci), lambda n, t: (n, t + 1, 0, 0))
    w_spec = pl.BlockSpec((4, Ci, Npad), lambda n, t: (0, 0, 0))
    b_spec = pl.BlockSpec((1, Npad), lambda n, t: (0, 0))
    y_spec = pl.BlockSpec((1, 1, T_w, Npad), lambda n, t: (n, t, 0, 0))
    cp = pltpu.CompilerParams(dimension_semantics=("parallel", "arbitrary"),
                              vmem_limit_bytes=VMEM_LIMIT_BYTES)

    if mode == "bn_relu":
        col_spec = pl.BlockSpec((2, Npad), lambda n, t: (0, 0))
        stats_spec = pl.BlockSpec((1, 8, Npad), lambda n, t: (n, 0, 0))
        y4, stats = pl.pallas_call(
            functools.partial(_deconv_bn_stats_kernel, Qh, Qw),
            grid=(N, T_h),
            in_specs=[top_spec, bot_spec, w_spec, b_spec, col_spec],
            out_specs=(y_spec, stats_spec),
            out_shape=(jax.ShapeDtypeStruct((N, T_h, T_w, Npad), jnp.float32),
                       jax.ShapeDtypeStruct((N, 8, Npad), jnp.float32)),
            compiler_params=cp,
        )(xp, xp, arrs["w"], arrs["b"], arrs["colmeta"])

        # Tiny host-side combine: fold per-image partial sums + the 4 parity columns and
        # derive the BN affine (training-mode batch stats, biased variance, gamma=1, beta=0).
        s = jnp.sum(stats[:, 0:2, :Nc], axis=0).reshape(2, 4, Co).sum(axis=1)  # (2, Co)
        count = float(N * Ho * Wo)
        mean = s[0] / count
        var = jnp.maximum(s[1] / count - mean * mean, 0.0)         # E[x^2] - mean^2
        inv = lax.rsqrt(var + EPS)
        scale = jnp.pad(jnp.tile(inv, 4), (0, Npad - Nc)).reshape(1, 1, Npad)
        shift = jnp.pad(jnp.tile(-mean * inv, 4), (0, Npad - Nc)).reshape(1, 1, Npad)

        # BN apply + ReLU with large row tiles; store the activation in bf16.
        M = N * T_h
        row_bytes = T_w * Npad * 4
        bh = _largest_divisor_leq(M, max(1, TARGET_TILE_BYTES // row_bytes))
        out3 = pl.pallas_call(
            _bn_relu_kernel,
            grid=(M // bh,),
            in_specs=[pl.BlockSpec((bh, T_w, Npad), lambda i: (i, 0, 0)),
                      pl.BlockSpec((1, 1, Npad), lambda i: (0, 0, 0)),
                      pl.BlockSpec((1, 1, Npad), lambda i: (0, 0, 0))],
            out_specs=pl.BlockSpec((bh, T_w, Npad), lambda i: (i, 0, 0)),
            out_shape=jax.ShapeDtypeStruct((M, T_w, Npad), jnp.bfloat16),
            compiler_params=pltpu.CompilerParams(dimension_semantics=("parallel",),
                                                 vmem_limit_bytes=VMEM_LIMIT_BYTES),
        )(y4.reshape(M, T_w, Npad), scale, shift)
        out4 = out3.reshape(N, T_h, T_w, Npad)
    else:  # "tanh" output layer (final output stays f32)
        out4 = pl.pallas_call(
            _deconv_tanh_kernel,
            grid=(N, T_h),
            in_specs=[top_spec, bot_spec, w_spec, b_spec],
            out_specs=y_spec,
            out_shape=jax.ShapeDtypeStruct((N, T_h, T_w, Npad), jnp.float32),
            compiler_params=cp,
        )(xp, xp, arrs["w"], arrs["b"])

    sub = out4[..., :Nc].reshape(N, T_h, T_w, 2, 2, Co)
    return _pixel_shuffle(sub, padding)


# --------------------------------------------------------------------------------------
# Generator: image_layer (deconv p=0 + BN + ReLU), hidden layers (deconv p=1 + BN + ReLU),
# output layer (deconv p=1 + Tanh).  Matches the PyTorch module with default k=4, s=2.
# --------------------------------------------------------------------------------------
def init_generator_params(key, input_dim, filter_sizes, output_dim, K=4):
    params = []
    dims = [input_dim] + list(filter_sizes) + [output_dim]
    for i in range(len(dims) - 1):
        key, wk = jax.random.split(key)
        w = 0.02 * jax.random.normal(wk, (dims[i], dims[i + 1], K, K), jnp.float32)
        b = jnp.zeros((dims[i + 1],), jnp.float32)
        params.append((w, b))
    return params


def generator_forward(noise_nchw, arrays, metas):
    x = jnp.transpose(noise_nchw, (0, 2, 3, 1)).astype(jnp.bfloat16)   # NCHW -> NHWC, bf16
    for arrs, meta in zip(arrays, metas):
        x = deconv_layer(x, arrs, meta)
    return jnp.transpose(x, (0, 3, 1, 2))                               # NHWC -> NCHW


# Pure-JAX reference (lax conv with lhs_dilation), matched bf16 operands / f32 accumulation.
def reference_forward(noise_nchw, params):
    x = jnp.transpose(noise_nchw, (0, 2, 3, 1))
    n = len(params)
    for i, (w, b) in enumerate(params):
        p = 0 if i == 0 else 1
        wflip = jnp.flip(w, axis=(2, 3)).transpose(2, 3, 0, 1)          # HWIO
        y = lax.conv_general_dilated(
            x.astype(jnp.bfloat16), wflip.astype(jnp.bfloat16),
            window_strides=(1, 1), padding=[(3 - p, 3 - p)] * 2,
            lhs_dilation=(2, 2), dimension_numbers=("NHWC", "HWIO", "NHWC"),
            preferred_element_type=jnp.float32) + b
        if i < n - 1:
            mean = jnp.mean(y, axis=(0, 1, 2), keepdims=True)
            var = jnp.mean(jnp.square(y - mean), axis=(0, 1, 2), keepdims=True)
            y = jnp.maximum((y - mean) * lax.rsqrt(var + EPS), 0.0)
        else:
            y = jnp.tanh(y)
        x = y
    return jnp.transpose(x, (0, 3, 1, 2))


if __name__ == "__main__":
    key = jax.random.PRNGKey(0)
    pkey, nkey = jax.random.split(key)

    # Small DCGAN config: Generator(input_dim=16, filter_sizes=[32, 16], output_dim=3)
    input_dim, filter_sizes, output_dim = 16, [32, 16], 3
    params = init_generator_params(pkey, input_dim, filter_sizes, output_dim)
    arrays, metas = pack_generator_params(params)      # one-time weight pre-packing

    # DCGAN noise input: (N, latent_dim, 1, 1), NCHW like PyTorch.
    noise = jax.random.normal(nkey, (2, input_dim, 1, 1), jnp.float32)

    fwd = jax.jit(functools.partial(generator_forward, metas=metas))
    out = jax.block_until_ready(fwd(noise, arrays))

    assert out.shape == (2, output_dim, 16, 16), out.shape
    ref = reference_forward(noise, params)
    max_err = float(jnp.max(jnp.abs(out - ref)))
    assert jnp.allclose(out, ref, rtol=2e-3, atol=2e-3), max_err

    print("KERNEL_OK")
</pallas_src>

<mosaic_0001>
module attributes {stable_mosaic.version = 11 : i64} {
  func.func @_bn_relu_kernel(%arg0: i32, %arg1: memref<4x2x128xf32, #tpu.memory_space<vmem>>, %arg2: memref<1x1x128xf32, #tpu.memory_space<vmem>>, %arg3: memref<1x1x128xf32, #tpu.memory_space<vmem>>, %arg4: memref<4x2x128xbf16, #tpu.memory_space<vmem>>) attributes {dimension_semantics = [#tpu.dimension_semantics<parallel>], iteration_bounds = array<i64: 1>, scalar_prefetch = 0 : i64, scratch_operands = 0 : i64, tpu.core_type = #tpu.core_type<tc>, window_params = [{transform_indices = @transform_0, window_bounds = array<i64: 4, 2, 128>}, {pipeline_mode = #tpu.pipeline_mode<synchronous>, transform_indices = @transform_1, window_bounds = array<i64: 1, 1, 128>}, {pipeline_mode = #tpu.pipeline_mode<synchronous>, transform_indices = @transform_2, window_bounds = array<i64: 1, 1, 128>}, {transform_indices = @transform_3, window_bounds = array<i64: 4, 2, 128>}]} {
    %c0 = arith.constant 0 : index
    %c0_0 = arith.constant 0 : index
    %c0_1 = arith.constant 0 : index
    %0 = vector.load %arg1[%c0, %c0_0, %c0_1] : memref<4x2x128xf32, #tpu.memory_space<vmem>>, vector<4x2x128xf32>
    %c0_2 = arith.constant 0 : index
    %c0_3 = arith.constant 0 : index
    %c0_4 = arith.constant 0 : index
    %1 = vector.load %arg2[%c0_2, %c0_3, %c0_4] : memref<1x1x128xf32, #tpu.memory_space<vmem>>, vector<1x1x128xf32>
    %2 = vector.broadcast %1 : vector<1x1x128xf32> to vector<4x2x128xf32>
    %3 = arith.mulf %0, %2 : vector<4x2x128xf32>
    %c0_5 = arith.constant 0 : index
    %c0_6 = arith.constant 0 : index
    %c0_7 = arith.constant 0 : index
    %4 = vector.load %arg3[%c0_5, %c0_6, %c0_7] : memref<1x1x128xf32, #tpu.memory_space<vmem>>, vector<1x1x128xf32>
    %5 = vector.broadcast %4 : vector<1x1x128xf32> to vector<4x2x128xf32>
    %6 = arith.addf %3, %5 : vector<4x2x128xf32>
    %cst = arith.constant 0.000000e+00 : f32
    %7 = vector.broadcast %cst : f32 to vector<4x2x128xf32>
    %8 = arith.maximumf %6, %7 : vector<4x2x128xf32>
    %9 = arith.truncf %8 : vector<4x2x128xf32> to vector<4x2x128xbf16>
    %c0_8 = arith.constant 0 : index
    %c0_9 = arith.constant 0 : index
    %c0_10 = arith.constant 0 : index
    %10 = vector.load %arg4[%c0_8, %c0_9, %c0_10] : memref<4x2x128xbf16, #tpu.memory_space<vmem>>, vector<4x2x128xbf16>
    tpu.vector_store %arg4[%c0_8, %c0_9, %c0_10], %9 {strides = array<i32>} : memref<4x2x128xbf16, #tpu.memory_space<vmem>>, vector<4x2x128xbf16>,
    return
  }
  func.func @transform_0(%arg0: i32) -> (i32, i32, i32) {
    %c0_i32 = arith.constant 0 : i32
    %c0_i32_0 = arith.constant 0 : i32
    %c0_i32_1 = arith.constant 0 : i32
    return %arg0, %c0_i32, %c0_i32_0 : i32, i32, i32
  }
  func.func @transform_1(%arg0: i32) -> (i32, i32, i32) {
    %c0_i32 = arith.constant 0 : i32
    %c0_i32_0 = arith.constant 0 : i32
    %c0_i32_1 = arith.constant 0 : i32
    %c0_i32_2 = arith.constant 0 : i32
    return %c0_i32, %c0_i32_0, %c0_i32_1 : i32, i32, i32
  }
  func.func @transform_2(%arg0: i32) -> (i32, i32, i32) {
    %c0_i32 = arith.constant 0 : i32
    %c0_i32_0 = arith.constant 0 : i32
    %c0_i32_1 = arith.constant 0 : i32
    %c0_i32_2 = arith.constant 0 : i32
    return %c0_i32, %c0_i32_0, %c0_i32_1 : i32, i32, i32
  }
  func.func @transform_3(%arg0: i32) -> (i32, i32, i32) {
    %c0_i32 = arith.constant 0 : i32
    %c0_i32_0 = arith.constant 0 : i32
    %c0_i32_1 = arith.constant 0 : i32
    return %arg0, %c0_i32, %c0_i32_0 : i32, i32, i32
  }
}

module attributes {stable_mosaic.version = 11 : i64} {
  func.func @_deconv_bn_stats_kernel(%arg0: i32, %arg1: i32, %arg2: memref<1x1x3x16xbf16, #tpu.memory_space<vmem>>, %arg3: memref<1x1x3x16xbf16, #tpu.memory_space<vmem>>, %arg4: memref<4x16x128xbf16, #tpu.memory_space<vmem>>, %arg5: memref<1x128xf32, #tpu.memory_space<vmem>>, %arg6: memref<2x128xi32, #tpu.memory_space<vmem>>, %arg7: memref<1x1x2x128xf32, #tpu.memory_space<vmem>>, %arg8: memref<1x8x128xf32, #tpu.memory_space<vmem>>) attributes {dimension_semantics = [#tpu.dimension_semantics<parallel>, #tpu.dimension_semantics<arbitrary>], iteration_bounds = array<i64: 2, 2>, scalar_prefetch = 0 : i64, scratch_operands = 0 : i64, tpu.core_type = #tpu.core_type<tc>, window_params = [{transform_indices = @transform_0, window_bounds = array<i64: 1, 1, 3, 16>}, {transform_indices = @transform_1, window_bounds = array<i64: 1, 1, 3, 16>}, {pipeline_mode = #tpu.pipeline_mode<synchronous>, transform_indices = @transform_2, window_bounds = array<i64: 4, 16, 128>}, {pipeline_mode = #tpu.pipeline_mode<synchronous>, transform_indices = @transform_3, window_bounds = array<i64: 1, 128>}, {pipeline_mode = #tpu.pipeline_mode<synchronous>, transform_indices = @transform_4, window_bounds = array<i64: 2, 128>}, {transform_indices = @transform_5, window_bounds = array<i64: 1, 1, 2, 128>}, {transform_indices = @transform_6, window_bounds = array<i64: 1, 8, 128>}]} {
    %c0_i32 = arith.constant 0 : i32
    %0 = arith.cmpi eq, %arg1, %c0_i32 : i32
    %1 = arith.extui %0 : i1 to i32
    %c0_i32_0 = arith.constant 0 : i32
    %2 = arith.cmpi ne, %1, %c0_i32_0 : i32
    scf.if %2 {
      %cst_47 = arith.constant 0.000000e+00 : f32
      %71 = vector.broadcast %cst_47 : f32 to vector<1x8x128xf32>
      %c0_48 = arith.constant 0 : index
      %c0_49 = arith.constant 0 : index
      %c0_50 = arith.constant 0 : index
      %72 = vector.load %arg8[%c0_48, %c0_49, %c0_50] : memref<1x8x128xf32, #tpu.memory_space<vmem>>, vector<1x8x128xf32>
      tpu.vector_store %arg8[%c0_48, %c0_49, %c0_50], %71 {strides = array<i32>} : memref<1x8x128xf32, #tpu.memory_space<vmem>>, vector<1x8x128xf32>,
    } else {
    }
    %c0 = arith.constant 0 : index
    %c0_1 = arith.constant 0 : index
    %c0_2 = arith.constant 0 : index
    %c0_3 = arith.constant 0 : index
    %3 = vector.load %arg2[%c0, %c0_1, %c0_2, %c0_3] : memref<1x1x3x16xbf16, #tpu.memory_space<vmem>>, vector<1x1x3x16xbf16>
    %4 = vector.shape_cast %3 : vector<1x1x3x16xbf16> to vector<3x16xbf16>
    %c0_4 = arith.constant 0 : index
    %c0_5 = arith.constant 0 : index
    %c0_6 = arith.constant 0 : index
    %c0_7 = arith.constant 0 : index
    %5 = vector.load %arg3[%c0_4, %c0_5, %c0_6, %c0_7] : memref<1x1x3x16xbf16, #tpu.memory_space<vmem>>, vector<1x1x3x16xbf16>
    %6 = vector.shape_cast %5 : vector<1x1x3x16xbf16> to vector<3x16xbf16>
    %7 = vector.extract_strided_slice %4 {offsets = [0, 0], sizes = [2, 16], strides = [1, 1]} : vector<3x16xbf16> to vector<2x16xbf16>
    %c0_8 = arith.constant 0 : index
    %c0_9 = arith.constant 0 : index
    %c0_10 = arith.constant 0 : index
    %8 = vector.load %arg4[%c0_8, %c0_9, %c0_10] : memref<4x16x128xbf16, #tpu.memory_space<vmem>>, vector<1x16x128xbf16>
    %9 = vector.shape_cast %8 : vector<1x16x128xbf16> to vector<16x128xbf16>
    %cst = arith.constant dense<0.000000e+00> : vector<2x128xf32>
    %10 = tpu.matmul %7, %9, %cst {dimension_numbers = #tpu.dot_dimension_numbers<[1], [0], [0], [1], [0, 0, 1, 1], [], []>} : vector<2x16xbf16>, vector<16x128xbf16>, vector<2x128xf32> -> vector<2x128xf32>
    %11 = vector.extract_strided_slice %4 {offsets = [1, 0], sizes = [2, 16], strides = [1, 1]} : vector<3x16xbf16> to vector<2x16xbf16>
    %c1 = arith.constant 1 : index
    %c0_11 = arith.constant 0 : index
    %c0_12 = arith.constant 0 : index
    %12 = vector.load %arg4[%c1, %c0_11, %c0_12] : memref<4x16x128xbf16, #tpu.memory_space<vmem>>, vector<1x16x128xbf16>
    %13 = vector.shape_cast %12 : vector<1x16x128xbf16> to vector<16x128xbf16>
    %cst_13 = arith.constant dense<0.000000e+00> : vector<2x128xf32>
    %14 = tpu.matmul %11, %13, %cst_13 {dimension_numbers = #tpu.dot_dimension_numbers<[1], [0], [0], [1], [0, 0, 1, 1], [], []>} : vector<2x16xbf16>, vector<16x128xbf16>, vector<2x128xf32> -> vector<2x128xf32>
    %15 = arith.addf %10, %14 : vector<2x128xf32>
    %16 = vector.extract_strided_slice %6 {offsets = [0, 0], sizes = [2, 16], strides = [1, 1]} : vector<3x16xbf16> to vector<2x16xbf16>
    %c2 = arith.constant 2 : index
    %c0_14 = arith.constant 0 : index
    %c0_15 = arith.constant 0 : index
    %17 = vector.load %arg4[%c2, %c0_14, %c0_15] : memref<4x16x128xbf16, #tpu.memory_space<vmem>>, vector<1x16x128xbf16>
    %18 = vector.shape_cast %17 : vector<1x16x128xbf16> to vector<16x128xbf16>
    %cst_16 = arith.constant dense<0.000000e+00> : vector<2x128xf32>
    %19 = tpu.matmul %16, %18, %cst_16 {dimension_numbers = #tpu.dot_dimension_numbers<[1], [0], [0], [1], [0, 0, 1, 1], [], []>} : vector<2x16xbf16>, vector<16x128xbf16>, vector<2x128xf32> -> vector<2x128xf32>
    %20 = arith.addf %15, %19 : vector<2x128xf32>
    %21 = vector.extract_strided_slice %6 {offsets = [1, 0], sizes = [2, 16], strides = [1, 1]} : vector<3x16xbf16> to vector<2x16xbf16>
    %c3 = arith.constant 3 : index
    %c0_17 = arith.constant 0 : index
    %c0_18 = arith.constant 0 : index
    %22 = vector.load %arg4[%c3, %c0_17, %c0_18] : memref<4x16x128xbf16, #tpu.memory_space<vmem>>, vector<1x16x128xbf16>
    %23 = vector.shape_cast %22 : vector<1x16x128xbf16> to vector<16x128xbf16>
    %cst_19 = arith.constant dense<0.000000e+00> : vector<2x128xf32>
    %24 = tpu.matmul %21, %23, %cst_19 {dimension_numbers = #tpu.dot_dimension_numbers<[1], [0], [0], [1], [0, 0, 1, 1], [], []>} : vector<2x16xbf16>, vector<16x128xbf16>, vector<2x128xf32> -> vector<2x128xf32>
    %25 = arith.addf %20, %24 : vector<2x128xf32>
    %c0_20 = arith.constant 0 : index
    %c0_21 = arith.constant 0 : index
    %26 = vector.load %arg5[%c0_20, %c0_21] : memref<1x128xf32, #tpu.memory_space<vmem>>, vector<1x128xf32>
    %27 = vector.broadcast %26 : vector<1x128xf32> to vector<2x128xf32>
    %28 = arith.addf %25, %27 : vector<2x128xf32>
    %c0_22 = arith.constant 0 : index
    %c0_23 = arith.constant 0 : index
    %c0_24 = arith.constant 0 : index
    %c0_25 = arith.constant 0 : index
    %29 = vector.load %arg7[%c0_22, %c0_23, %c0_24, %c0_25] : memref<1x1x2x128xf32, #tpu.memory_space<vmem>>, vector<1x1x2x128xf32>
    %30 = vector.shape_cast %29 : vector<1x1x2x128xf32> to vector<2x128xf32>
    %31 = vector.shape_cast %28 : vector<2x128xf32> to vector<1x1x2x128xf32>
    tpu.vector_store %arg7[%c0_22, %c0_23, %c0_24, %c0_25], %31 {strides = array<i32>} : memref<1x1x2x128xf32, #tpu.memory_space<vmem>>, vector<1x1x2x128xf32>,
    %c0_26 = arith.constant 0 : index
    %c0_27 = arith.constant 0 : index
    %32 = vector.load %arg6[%c0_26, %c0_27] : memref<2x128xi32, #tpu.memory_space<vmem>>, vector<1x128xi32>
    %c1_28 = arith.constant 1 : index
    %c0_29 = arith.constant 0 : index
    %33 = vector.load %arg6[%c1_28, %c0_29] : memref<2x128xi32, #tpu.memory_space<vmem>>, vector<1x128xi32>
    %34 = vector.broadcast %arg1 : i32 to vector<1x128xi32>
    %35 = arith.subi %34, %32 : vector<1x128xi32>
    %36 = tpu.iota {dimensions = array<i32: 0>} : vector<2x128xi32>
    %37 = vector.broadcast %33 : vector<1x128xi32> to vector<2x128xi32>
    %38 = arith.subi %36, %37 : vector<2x128xi32>
    %c0_i32_30 = arith.constant 0 : i32
    %39 = vector.broadcast %c0_i32_30 : i32 to vector<1x128xi32>
    %40 = arith.cmpi sge, %35, %39 : vector<1x128xi32>
    %c2_i32 = arith.constant 2 : i32
    %41 = vector.broadcast %c2_i32 : i32 to vector<1x128xi32>
    %42 = arith.cmpi slt, %35, %41 : vector<1x128xi32>
    %43 = arith.andi %40, %42 : vector<1x128xi1>
    %c0_i32_31 = arith.constant 0 : i32
    %44 = vector.broadcast %c0_i32_31 : i32 to vector<2x128xi32>
    %45 = arith.cmpi sge, %38, %44 : vector<2x128xi32>
    %46 = vector.broadcast %43 : vector<1x128xi1> to vector<2x128xi1>
    %47 = arith.andi %46, %45 : vector<2x128xi1>
    %c2_i32_32 = arith.constant 2 : i32
    %48 = vector.broadcast %c2_i32_32 : i32 to vector<2x128xi32>
    %49 = arith.cmpi slt, %38, %48 : vector<2x128xi32>
    %50 = arith.andi %47, %49 : vector<2x128xi1>
    %51 = arith.extui %50 : vector<2x128xi1> to vector<2x128xi32>
    %52 = arith.sitofp %51 : vector<2x128xi32> to vector<2x128xf32>
    %53 = arith.mulf %28, %52 : vector<2x128xf32>
    %c0_33 = arith.constant 0 : index
    %c0_34 = arith.constant 0 : index
    %c0_35 = arith.constant 0 : index
    %54 = vector.load %arg8[%c0_33, %c0_34, %c0_35] : memref<1x8x128xf32, #tpu.memory_space<vmem>>, vector<1x1x128xf32>
    %55 = vector.shape_cast %54 : vector<1x1x128xf32> to vector<1x128xf32>
    %cst_36 = arith.constant dense<0.000000e+00> : vector<128xf32>
    %56 = vector.multi_reduction <add>, %53, %cst_36 [0] : vector<2x128xf32> to vector<128xf32>
    %57 = vector.shape_cast %56 : vector<128xf32> to vector<1x128xf32>
    %58 = arith.addf %55, %57 : vector<1x128xf32>
    %c0_37 = arith.constant 0 : index
    %c0_38 = arith.constant 0 : index
    %c0_39 = arith.constant 0 : index
    %59 = vector.load %arg8[%c0_37, %c0_38, %c0_39] : memref<1x8x128xf32, #tpu.memory_space<vmem>>, vector<1x1x128xf32>
    %60 = vector.shape_cast %59 : vector<1x1x128xf32> to vector<1x128xf32>
    %61 = vector.shape_cast %58 : vector<1x128xf32> to vector<1x1x128xf32>
    tpu.vector_store %arg8[%c0_37, %c0_38, %c0_39], %61 {strides = array<i32>} : memref<1x8x128xf32, #tpu.memory_space<vmem>>, vector<1x1x128xf32>,
    %c0_40 = arith.constant 0 : index
    %c1_41 = arith.constant 1 : index
    %c0_42 = arith.constant 0 : index
    %62 = vector.load %arg8[%c0_40, %c1_41, %c0_42] : memref<1x8x128xf32, #tpu.memory_space<vmem>>, vector<1x1x128xf32>
    %63 = vector.shape_cast %62 : vector<1x1x128xf32> to vector<1x128xf32>
    %64 = arith.mulf %53, %28 : vector<2x128xf32>
    %cst_43 = arith.constant dense<0.000000e+00> : vector<128xf32>
    %65 = vector.multi_reduction <add>, %64, %cst_43 [0] : vector<2x128xf32> to vector<128xf32>
    %66 = vector.shape_cast %65 : vector<128xf32> to vector<1x128xf32>
    %67 = arith.addf %63, %66 : vector<1x128xf32>
    %c0_44 = arith.constant 0 : index
    %c1_45 = arith.constant 1 : index
    %c0_46 = arith.constant 0 : index
    %68 = vector.load %arg8[%c0_44, %c1_45, %c0_46] : memref<1x8x128xf32, #tpu.memory_space<vmem>>, vector<1x1x128xf32>
    %69 = vector.shape_cast %68 : vector<1x1x128xf32> to vector<1x128xf32>
    %70 = vector.shape_cast %67 : vector<1x128xf32> to vector<1x1x128xf32>
    tpu.vector_store %arg8[%c0_44, %c1_45, %c0_46], %70 {strides = array<i32>} : memref<1x8x128xf32, #tpu.memory_space<vmem>>, vector<1x1x128xf32>,
    return
  }
  func.func @transform_0(%arg0: i32, %arg1: i32) -> (i32, i32, i32, i32) {
    %c0_i32 = arith.constant 0 : i32
    %c0_i32_0 = arith.constant 0 : i32
    %c0_i32_1 = arith.constant 0 : i32
    return %arg0, %arg1, %c0_i32, %c0_i32_0 : i32, i32, i32, i32
  }
  func.func @transform_1(%arg0: i32, %arg1: i32) -> (i32, i32, i32, i32) {
    %c1_i32 = arith.constant 1 : i32
    %0 = arith.addi %arg1, %c1_i32 : i32
    %c0_i32 = arith.constant 0 : i32
    %c0_i32_0 = arith.constant 0 : i32
    %c0_i32_1 = arith.constant 0 : i32
    return %arg0, %0, %c0_i32, %c0_i32_0 : i32, i32, i32, i32
  }
  func.func @transform_2(%arg0: i32, %arg1: i32) -> (i32, i32, i32) {
    %c0_i32 = arith.constant 0 : i32
    %c0_i32_0 = arith.constant 0 : i32
    %c0_i32_1 = arith.constant 0 : i32
    %c0_i32_2 = arith.constant 0 : i32
    return %c0_i32, %c0_i32_0, %c0_i32_1 : i32, i32, i32
  }
  func.func @transform_3(%arg0: i32, %arg1: i32) -> (i32, i32) {
    %c0_i32 = arith.constant 0 : i32
    %c0_i32_0 = arith.constant 0 : i32
    %c0_i32_1 = arith.constant 0 : i32
    return %c0_i32, %c0_i32_0 : i32, i32
  }
  func.func @transform_4(%arg0: i32, %arg1: i32) -> (i32, i32) {
    %c0_i32 = arith.constant 0 : i32
    %c0_i32_0 = arith.constant 0 : i32
    %c0_i32_1 = arith.constant 0 : i32
    return %c0_i32, %c0_i32_0 : i32, i32
  }
  func.func @transform_5(%arg0: i32, %arg1: i32) -> (i32, i32, i32, i32) {
    %c0_i32 = arith.constant 0 : i32
    %c0_i32_0 = arith.constant 0 : i32
    %c0_i32_1 = arith.constant 0 : i32
    return %arg0, %arg1, %c0_i32, %c0_i32_0 : i32, i32, i32, i32
  }
  func.func @transform_6(%arg0: i32, %arg1: i32) -> (i32, i32, i32) {
    %c0_i32 = arith.constant 0 : i32
    %c0_i32_0 = arith.constant 0 : i32
    %c0_i32_1 = arith.constant 0 : i32
    return %arg0, %c0_i32, %c0_i32_0 : i32, i32, i32
  }
}

module attributes {stable_mosaic.version = 11 : i64} {
  func.func @_deconv_bn_stats_kernel(%arg0: i32, %arg1: i32, %arg2: memref<1x1x6x32xbf16, #tpu.memory_space<vmem>>, %arg3: memref<1x1x6x32xbf16, #tpu.memory_space<vmem>>, %arg4: memref<4x32x128xbf16, #tpu.memory_space<vmem>>, %arg5: memref<1x128xf32, #tpu.memory_space<vmem>>, %arg6: memref<2x128xi32, #tpu.memory_space<vmem>>, %arg7: memref<1x1x5x128xf32, #tpu.memory_space<vmem>>, %arg8: memref<1x8x128xf32, #tpu.memory_space<vmem>>) attributes {dimension_semantics = [#tpu.dimension_semantics<parallel>, #tpu.dimension_semantics<arbitrary>], iteration_bounds = array<i64: 2, 5>, scalar_prefetch = 0 : i64, scratch_operands = 0 : i64, tpu.core_type = #tpu.core_type<tc>, window_params = [{transform_indices = @transform_0, window_bounds = array<i64: 1, 1, 6, 32>}, {transform_indices = @transform_1, window_bounds = array<i64: 1, 1, 6, 32>}, {pipeline_mode = #tpu.pipeline_mode<synchronous>, transform_indices = @transform_2, window_bounds = array<i64: 4, 32, 128>}, {pipeline_mode = #tpu.pipeline_mode<synchronous>, transform_indices = @transform_3, window_bounds = array<i64: 1, 128>}, {pipeline_mode = #tpu.pipeline_mode<synchronous>, transform_indices = @transform_4, window_bounds = array<i64: 2, 128>}, {transform_indices = @transform_5, window_bounds = array<i64: 1, 1, 5, 128>}, {transform_indices = @transform_6, window_bounds = array<i64: 1, 8, 128>}]} {
    %c0_i32 = arith.constant 0 : i32
    %0 = arith.cmpi eq, %arg1, %c0_i32 : i32
    %1 = arith.extui %0 : i1 to i32
    %c0_i32_0 = arith.constant 0 : i32
    %2 = arith.cmpi ne, %1, %c0_i32_0 : i32
    scf.if %2 {
      %cst_47 = arith.constant 0.000000e+00 : f32
      %71 = vector.broadcast %cst_47 : f32 to vector<1x8x128xf32>
      %c0_48 = arith.constant 0 : index
      %c0_49 = arith.constant 0 : index
      %c0_50 = arith.constant 0 : index
      %72 = vector.load %arg8[%c0_48, %c0_49, %c0_50] : memref<1x8x128xf32, #tpu.memory_space<vmem>>, vector<1x8x128xf32>
      tpu.vector_store %arg8[%c0_48, %c0_49, %c0_50], %71 {strides = array<i32>} : memref<1x8x128xf32, #tpu.memory_space<vmem>>, vector<1x8x128xf32>,
    } else {
    }
    %c0 = arith.constant 0 : index
    %c0_1 = arith.constant 0 : index
    %c0_2 = arith.constant 0 : index
    %c0_3 = arith.constant 0 : index
    %3 = vector.load %arg2[%c0, %c0_1, %c0_2, %c0_3] : memref<1x1x6x32xbf16, #tpu.memory_space<vmem>>, vector<1x1x6x32xbf16>
    %4 = vector.shape_cast %3 : vector<1x1x6x32xbf16> to vector<6x32xbf16>
    %c0_4 = arith.constant 0 : index
    %c0_5 = arith.constant 0 : index
    %c0_6 = arith.constant 0 : index
    %c0_7 = arith.constant 0 : index
    %5 = vector.load %arg3[%c0_4, %c0_5, %c0_6, %c0_7] : memref<1x1x6x32xbf16, #tpu.memory_space<vmem>>, vector<1x1x6x32xbf16>
    %6 = vector.shape_cast %5 : vector<1x1x6x32xbf16> to vector<6x32xbf16>
    %7 = vector.extract_strided_slice %4 {offsets = [0, 0], sizes = [5, 32], strides = [1, 1]} : vector<6x32xbf16> to vector<5x32xbf16>
    %c0_8 = arith.constant 0 : index
    %c0_9 = arith.constant 0 : index
    %c0_10 = arith.constant 0 : index
    %8 = vector.load %arg4[%c0_8, %c0_9, %c0_10] : memref<4x32x128xbf16, #tpu.memory_space<vmem>>, vector<1x32x128xbf16>
    %9 = vector.shape_cast %8 : vector<1x32x128xbf16> to vector<32x128xbf16>
    %cst = arith.constant dense<0.000000e+00> : vector<5x128xf32>
    %10 = tpu.matmul %7, %9, %cst {dimension_numbers = #tpu.dot_dimension_numbers<[1], [0], [0], [1], [0, 0, 1, 1], [], []>} : vector<5x32xbf16>, vector<32x128xbf16>, vector<5x128xf32> -> vector<5x128xf32>
    %11 = vector.extract_strided_slice %4 {offsets = [1, 0], sizes = [5, 32], strides = [1, 1]} : vector<6x32xbf16> to vector<5x32xbf16>
    %c1 = arith.constant 1 : index
    %c0_11 = arith.constant 0 : index
    %c0_12 = arith.constant 0 : index
    %12 = vector.load %arg4[%c1, %c0_11, %c0_12] : memref<4x32x128xbf16, #tpu.memory_space<vmem>>, vector<1x32x128xbf16>
    %13 = vector.shape_cast %12 : vector<1x32x128xbf16> to vector<32x128xbf16>
    %cst_13 = arith.constant dense<0.000000e+00> : vector<5x128xf32>
    %14 = tpu.matmul %11, %13, %cst_13 {dimension_numbers = #tpu.dot_dimension_numbers<[1], [0], [0], [1], [0, 0, 1, 1], [], []>} : vector<5x32xbf16>, vector<32x128xbf16>, vector<5x128xf32> -> vector<5x128xf32>
    %15 = arith.addf %10, %14 : vector<5x128xf32>
    %16 = vector.extract_strided_slice %6 {offsets = [0, 0], sizes = [5, 32], strides = [1, 1]} : vector<6x32xbf16> to vector<5x32xbf16>
    %c2 = arith.constant 2 : index
    %c0_14 = arith.constant 0 : index
    %c0_15 = arith.constant 0 : index
    %17 = vector.load %arg4[%c2, %c0_14, %c0_15] : memref<4x32x128xbf16, #tpu.memory_space<vmem>>, vector<1x32x128xbf16>
    %18 = vector.shape_cast %17 : vector<1x32x128xbf16> to vector<32x128xbf16>
    %cst_16 = arith.constant dense<0.000000e+00> : vector<5x128xf32>
    %19 = tpu.matmul %16, %18, %cst_16 {dimension_numbers = #tpu.dot_dimension_numbers<[1], [0], [0], [1], [0, 0, 1, 1], [], []>} : vector<5x32xbf16>, vector<32x128xbf16>, vector<5x128xf32> -> vector<5x128xf32>
    %20 = arith.addf %15, %19 : vector<5x128xf32>
    %21 = vector.extract_strided_slice %6 {offsets = [1, 0], sizes = [5, 32], strides = [1, 1]} : vector<6x32xbf16> to vector<5x32xbf16>
    %c3 = arith.constant 3 : index
    %c0_17 = arith.constant 0 : index
    %c0_18 = arith.constant 0 : index
    %22 = vector.load %arg4[%c3, %c0_17, %c0_18] : memref<4x32x128xbf16, #tpu.memory_space<vmem>>, vector<1x32x128xbf16>
    %23 = vector.shape_cast %22 : vector<1x32x128xbf16> to vector<32x128xbf16>
    %cst_19 = arith.constant dense<0.000000e+00> : vector<5x128xf32>
    %24 = tpu.matmul %21, %23, %cst_19 {dimension_numbers = #tpu.dot_dimension_numbers<[1], [0], [0], [1], [0, 0, 1, 1], [], []>} : vector<5x32xbf16>, vector<32x128xbf16>, vector<5x128xf32> -> vector<5x128xf32>
    %25 = arith.addf %20, %24 : vector<5x128xf32>
    %c0_20 = arith.constant 0 : index
    %c0_21 = arith.constant 0 : index
    %26 = vector.load %arg5[%c0_20, %c0_21] : memref<1x128xf32, #tpu.memory_space<vmem>>, vector<1x128xf32>
    %27 = vector.broadcast %26 : vector<1x128xf32> to vector<5x128xf32>
    %28 = arith.addf %25, %27 : vector<5x128xf32>
    %c0_22 = arith.constant 0 : index
    %c0_23 = arith.constant 0 : index
    %c0_24 = arith.constant 0 : index
    %c0_25 = arith.constant 0 : index
    %29 = vector.load %arg7[%c0_22, %c0_23, %c0_24, %c0_25] : memref<1x1x5x128xf32, #tpu.memory_space<vmem>>, vector<1x1x5x128xf32>
    %30 = vector.shape_cast %29 : vector<1x1x5x128xf32> to vector<5x128xf32>
    %31 = vector.shape_cast %28 : vector<5x128xf32> to vector<1x1x5x128xf32>
    tpu.vector_store %arg7[%c0_22, %c0_23, %c0_24, %c0_25], %31 {strides = array<i32>} : memref<1x1x5x128xf32, #tpu.memory_space<vmem>>, vector<1x1x5x128xf32>,
    %c0_26 = arith.constant 0 : index
    %c0_27 = arith.constant 0 : index
    %32 = vector.load %arg6[%c0_26, %c0_27] : memref<2x128xi32, #tpu.memory_space<vmem>>, vector<1x128xi32>
    %c1_28 = arith.constant 1 : index
    %c0_29 = arith.constant 0 : index
    %33 = vector.load %arg6[%c1_28, %c0_29] : memref<2x128xi32, #tpu.memory_space<vmem>>, vector<1x128xi32>
    %34 = vector.broadcast %arg1 : i32 to vector<1x128xi32>
    %35 = arith.subi %34, %32 : vector<1x128xi32>
    %36 = tpu.iota {dimensions = array<i32: 0>} : vector<5x128xi32>
    %37 = vector.broadcast %33 : vector<1x128xi32> to vector<5x128xi32>
    %38 = arith.subi %36, %37 : vector<5x128xi32>
    %c0_i32_30 = arith.constant 0 : i32
    %39 = vector.broadcast %c0_i32_30 : i32 to vector<1x128xi32>
    %40 = arith.cmpi sge, %35, %39 : vector<1x128xi32>
    %c4_i32 = arith.constant 4 : i32
    %41 = vector.broadcast %c4_i32 : i32 to vector<1x128xi32>
    %42 = arith.cmpi slt, %35, %41 : vector<1x128xi32>
    %43 = arith.andi %40, %42 : vector<1x128xi1>
    %c0_i32_31 = arith.constant 0 : i32
    %44 = vector.broadcast %c0_i32_31 : i32 to vector<5x128xi32>
    %45 = arith.cmpi sge, %38, %44 : vector<5x128xi32>
    %46 = vector.broadcast %43 : vector<1x128xi1> to vector<5x128xi1>
    %47 = arith.andi %46, %45 : vector<5x128xi1>
    %c4_i32_32 = arith.constant 4 : i32
    %48 = vector.broadcast %c4_i32_32 : i32 to vector<5x128xi32>
    %49 = arith.cmpi slt, %38, %48 : vector<5x128xi32>
    %50 = arith.andi %47, %49 : vector<5x128xi1>
    %51 = arith.extui %50 : vector<5x128xi1> to vector<5x128xi32>
    %52 = arith.sitofp %51 : vector<5x128xi32> to vector<5x128xf32>
    %53 = arith.mulf %28, %52 : vector<5x128xf32>
    %c0_33 = arith.constant 0 : index
    %c0_34 = arith.constant 0 : index
    %c0_35 = arith.constant 0 : index
    %54 = vector.load %arg8[%c0_33, %c0_34, %c0_35] : memref<1x8x128xf32, #tpu.memory_space<vmem>>, vector<1x1x128xf32>
    %55 = vector.shape_cast %54 : vector<1x1x128xf32> to vector<1x128xf32>
    %cst_36 = arith.constant dense<0.000000e+00> : vector<128xf32>
    %56 = vector.multi_reduction <add>, %53, %cst_36 [0] : vector<5x128xf32> to vector<128xf32>
    %57 = vector.shape_cast %56 : vector<128xf32> to vector<1x128xf32>
    %58 = arith.addf %55, %57 : vector<1x128xf32>
    %c0_37 = arith.constant 0 : index
    %c0_38 = arith.constant 0 : index
    %c0_39 = arith.constant 0 : index
    %59 = vector.load %arg8[%c0_37, %c0_38, %c0_39] : memref<1x8x128xf32, #tpu.memory_space<vmem>>, vector<1x1x128xf32>
    %60 = vector.shape_cast %59 : vector<1x1x128xf32> to vector<1x128xf32>
    %61 = vector.shape_cast %58 : vector<1x128xf32> to vector<1x1x128xf32>
    tpu.vector_store %arg8[%c0_37, %c0_38, %c0_39], %61 {strides = array<i32>} : memref<1x8x128xf32, #tpu.memory_space<vmem>>, vector<1x1x128xf32>,
    %c0_40 = arith.constant 0 : index
    %c1_41 = arith.constant 1 : index
    %c0_42 = arith.constant 0 : index
    %62 = vector.load %arg8[%c0_40, %c1_41, %c0_42] : memref<1x8x128xf32, #tpu.memory_space<vmem>>, vector<1x1x128xf32>
    %63 = vector.shape_cast %62 : vector<1x1x128xf32> to vector<1x128xf32>
    %64 = arith.mulf %53, %28 : vector<5x128xf32>
    %cst_43 = arith.constant dense<0.000000e+00> : vector<128xf32>
    %65 = vector.multi_reduction <add>, %64, %cst_43 [0] : vector<5x128xf32> to vector<128xf32>
    %66 = vector.shape_cast %65 : vector<128xf32> to vector<1x128xf32>
    %67 = arith.addf %63, %66 : vector<1x128xf32>
    %c0_44 = arith.constant 0 : index
    %c1_45 = arith.constant 1 : index
    %c0_46 = arith.constant 0 : index
    %68 = vector.load %arg8[%c0_44, %c1_45, %c0_46] : memref<1x8x128xf32, #tpu.memory_space<vmem>>, vector<1x1x128xf32>
    %69 = vector.shape_cast %68 : vector<1x1x128xf32> to vector<1x128xf32>
    %70 = vector.shape_cast %67 : vector<1x128xf32> to vector<1x1x128xf32>
    tpu.vector_store %arg8[%c0_44, %c1_45, %c0_46], %70 {strides = array<i32>} : memref<1x8x128xf32, #tpu.memory_space<vmem>>, vector<1x1x128xf32>,
    return
  }
  func.func @transform_0(%arg0: i32, %arg1: i32) -> (i32, i32, i32, i32) {
    %c0_i32 = arith.constant 0 : i32
    %c0_i32_0 = arith.constant 0 : i32
    %c0_i32_1 = arith.constant 0 : i32
    return %arg0, %arg1, %c0_i32, %c0_i32_0 : i32, i32, i32, i32
  }
  func.func @transform_1(%arg0: i32, %arg1: i32) -> (i32, i32, i32, i32) {
    %c1_i32 = arith.constant 1 : i32
    %0 = arith.addi %arg1, %c1_i32 : i32
    %c0_i32 = arith.constant 0 : i32
    %c0_i32_0 = arith.constant 0 : i32
    %c0_i32_1 = arith.constant 0 : i32
    return %arg0, %0, %c0_i32, %c0_i32_0 : i32, i32, i32, i32
  }
  func.func @transform_2(%arg0: i32, %arg1: i32) -> (i32, i32, i32) {
    %c0_i32 = arith.constant 0 : i32
    %c0_i32_0 = arith.constant 0 : i32
    %c0_i32_1 = arith.constant 0 : i32
    %c0_i32_2 = arith.constant 0 : i32
    return %c0_i32, %c0_i32_0, %c0_i32_1 : i32, i32, i32
  }
  func.func @transform_3(%arg0: i32, %arg1: i32) -> (i32, i32) {
    %c0_i32 = arith.constant 0 : i32
    %c0_i32_0 = arith.constant 0 : i32
    %c0_i32_1 = arith.constant 0 : i32
    return %c0_i32, %c0_i32_0 : i32, i32
  }
  func.func @transform_4(%arg0: i32, %arg1: i32) -> (i32, i32) {
    %c0_i32 = arith.constant 0 : i32
    %c0_i32_0 = arith.constant 0 : i32
    %c0_i32_1 = arith.constant 0 : i32
    return %c0_i32, %c0_i32_0 : i32, i32
  }
  func.func @transform_5(%arg0: i32, %arg1: i32) -> (i32, i32, i32, i32) {
    %c0_i32 = arith.constant 0 : i32
    %c0_i32_0 = arith.constant 0 : i32
    %c0_i32_1 = arith.constant 0 : i32
    return %arg0, %arg1, %c0_i32, %c0_i32_0 : i32, i32, i32, i32
  }
  func.func @transform_6(%arg0: i32, %arg1: i32) -> (i32, i32, i32) {
    %c0_i32 = arith.constant 0 : i32
    %c0_i32_0 = arith.constant 0 : i32
    %c0_i32_1 = arith.constant 0 : i32
    return %arg0, %c0_i32, %c0_i32_0 : i32, i32, i32
  }
}

module attributes {stable_mosaic.version = 11 : i64} {
  func.func @_bn_relu_kernel(%arg0: i32, %arg1: memref<10x5x128xf32, #tpu.memory_space<vmem>>, %arg2: memref<1x1x128xf32, #tpu.memory_space<vmem>>, %arg3: memref<1x1x128xf32, #tpu.memory_space<vmem>>, %arg4: memref<10x5x128xbf16, #tpu.memory_space<vmem>>) attributes {dimension_semantics = [#tpu.dimension_semantics<parallel>], iteration_bounds = array<i64: 1>, scalar_prefetch = 0 : i64, scratch_operands = 0 : i64, tpu.core_type = #tpu.core_type<tc>, window_params = [{transform_indices = @transform_0, window_bounds = array<i64: 10, 5, 128>}, {pipeline_mode = #tpu.pipeline_mode<synchronous>, transform_indices = @transform_1, window_bounds = array<i64: 1, 1, 128>}, {pipeline_mode = #tpu.pipeline_mode<synchronous>, transform_indices = @transform_2, window_bounds = array<i64: 1, 1, 128>}, {transform_indices = @transform_3, window_bounds = array<i64: 10, 5, 128>}]} {
    %c0 = arith.constant 0 : index
    %c0_0 = arith.constant 0 : index
    %c0_1 = arith.constant 0 : index
    %0 = vector.load %arg1[%c0, %c0_0, %c0_1] : memref<10x5x128xf32, #tpu.memory_space<vmem>>, vector<10x5x128xf32>
    %c0_2 = arith.constant 0 : index
    %c0_3 = arith.constant 0 : index
    %c0_4 = arith.constant 0 : index
    %1 = vector.load %arg2[%c0_2, %c0_3, %c0_4] : memref<1x1x128xf32, #tpu.memory_space<vmem>>, vector<1x1x128xf32>
    %2 = vector.broadcast %1 : vector<1x1x128xf32> to vector<10x5x128xf32>
    %3 = arith.mulf %0, %2 : vector<10x5x128xf32>
    %c0_5 = arith.constant 0 : index
    %c0_6 = arith.constant 0 : index
    %c0_7 = arith.constant 0 : index
    %4 = vector.load %arg3[%c0_5, %c0_6, %c0_7] : memref<1x1x128xf32, #tpu.memory_space<vmem>>, vector<1x1x128xf32>
    %5 = vector.broadcast %4 : vector<1x1x128xf32> to vector<10x5x128xf32>
    %6 = arith.addf %3, %5 : vector<10x5x128xf32>
    %cst = arith.constant 0.000000e+00 : f32
    %7 = vector.broadcast %cst : f32 to vector<10x5x128xf32>
    %8 = arith.maximumf %6, %7 : vector<10x5x128xf32>
    %9 = arith.truncf %8 : vector<10x5x128xf32> to vector<10x5x128xbf16>
    %c0_8 = arith.constant 0 : index
    %c0_9 = arith.constant 0 : index
    %c0_10 = arith.constant 0 : index
    %10 = vector.load %arg4[%c0_8, %c0_9, %c0_10] : memref<10x5x128xbf16, #tpu.memory_space<vmem>>, vector<10x5x128xbf16>
    tpu.vector_store %arg4[%c0_8, %c0_9, %c0_10], %9 {strides = array<i32>} : memref<10x5x128xbf16, #tpu.memory_space<vmem>>, vector<10x5x128xbf16>,
    return
  }
  func.func @transform_0(%arg0: i32) -> (i32, i32, i32) {
    %c0_i32 = arith.constant 0 : i32
    %c0_i32_0 = arith.constant 0 : i32
    %c0_i32_1 = arith.constant 0 : i32
    return %arg0, %c0_i32, %c0_i32_0 : i32, i32, i32
  }
  func.func @transform_1(%arg0: i32) -> (i32, i32, i32) {
    %c0_i32 = arith.constant 0 : i32
    %c0_i32_0 = arith.constant 0 : i32
    %c0_i32_1 = arith.constant 0 : i32
    %c0_i32_2 = arith.constant 0 : i32
    return %c0_i32, %c0_i32_0, %c0_i32_1 : i32, i32, i32
  }
  func.func @transform_2(%arg0: i32) -> (i32, i32, i32) {
    %c0_i32 = arith.constant 0 : i32
    %c0_i32_0 = arith.constant 0 : i32
    %c0_i32_1 = arith.constant 0 : i32
    %c0_i32_2 = arith.constant 0 : i32
    return %c0_i32, %c0_i32_0, %c0_i32_1 : i32, i32, i32
  }
  func.func @transform_3(%arg0: i32) -> (i32, i32, i32) {
    %c0_i32 = arith.constant 0 : i32
    %c0_i32_0 = arith.constant 0 : i32
    %c0_i32_1 = arith.constant 0 : i32
    return %arg0, %c0_i32, %c0_i32_0 : i32, i32, i32
  }
}

module attributes {stable_mosaic.version = 11 : i64} {
  func.func @_deconv_tanh_kernel(%arg0: i32, %arg1: i32, %arg2: memref<1x1x10x16xbf16, #tpu.memory_space<vmem>>, %arg3: memref<1x1x10x16xbf16, #tpu.memory_space<vmem>>, %arg4: memref<4x16x128xbf16, #tpu.memory_space<vmem>>, %arg5: memref<1x128xf32, #tpu.memory_space<vmem>>, %arg6: memref<1x1x9x128xf32, #tpu.memory_space<vmem>>) attributes {dimension_semantics = [#tpu.dimension_semantics<parallel>, #tpu.dimension_semantics<arbitrary>], iteration_bounds = array<i64: 2, 9>, scalar_prefetch = 0 : i64, scratch_operands = 0 : i64, tpu.core_type = #tpu.core_type<tc>, window_params = [{transform_indices = @transform_0, window_bounds = array<i64: 1, 1, 10, 16>}, {transform_indices = @transform_1, window_bounds = array<i64: 1, 1, 10, 16>}, {pipeline_mode = #tpu.pipeline_mode<synchronous>, transform_indices = @transform_2, window_bounds = array<i64: 4, 16, 128>}, {pipeline_mode = #tpu.pipeline_mode<synchronous>, transform_indices = @transform_3, window_bounds = array<i64: 1, 128>}, {transform_indices = @transform_4, window_bounds = array<i64: 1, 1, 9, 128>}]} {
    %c0 = arith.constant 0 : index
    %c0_0 = arith.constant 0 : index
    %c0_1 = arith.constant 0 : index
    %c0_2 = arith.constant 0 : index
    %0 = vector.load %arg2[%c0, %c0_0, %c0_1, %c0_2] : memref<1x1x10x16xbf16, #tpu.memory_space<vmem>>, vector<1x1x10x16xbf16>
    %1 = vector.shape_cast %0 : vector<1x1x10x16xbf16> to vector<10x16xbf16>
    %c0_3 = arith.constant 0 : index
    %c0_4 = arith.constant 0 : index
    %c0_5 = arith.constant 0 : index
    %c0_6 = arith.constant 0 : index
    %2 = vector.load %arg3[%c0_3, %c0_4, %c0_5, %c0_6] : memref<1x1x10x16xbf16, #tpu.memory_space<vmem>>, vector<1x1x10x16xbf16>
    %3 = vector.shape_cast %2 : vector<1x1x10x16xbf16> to vector<10x16xbf16>
    %4 = vector.extract_strided_slice %1 {offsets = [0, 0], sizes = [9, 16], strides = [1, 1]} : vector<10x16xbf16> to vector<9x16xbf16>
    %c0_7 = arith.constant 0 : index
    %c0_8 = arith.constant 0 : index
    %c0_9 = arith.constant 0 : index
    %5 = vector.load %arg4[%c0_7, %c0_8, %c0_9] : memref<4x16x128xbf16, #tpu.memory_space<vmem>>, vector<1x16x128xbf16>
    %6 = vector.shape_cast %5 : vector<1x16x128xbf16> to vector<16x128xbf16>
    %cst = arith.constant dense<0.000000e+00> : vector<9x128xf32>
    %7 = tpu.matmul %4, %6, %cst {dimension_numbers = #tpu.dot_dimension_numbers<[1], [0], [0], [1], [0, 0, 1, 1], [], []>} : vector<9x16xbf16>, vector<16x128xbf16>, vector<9x128xf32> -> vector<9x128xf32>
    %8 = vector.extract_strided_slice %1 {offsets = [1, 0], sizes = [9, 16], strides = [1, 1]} : vector<10x16xbf16> to vector<9x16xbf16>
    %c1 = arith.constant 1 : index
    %c0_10 = arith.constant 0 : index
    %c0_11 = arith.constant 0 : index
    %9 = vector.load %arg4[%c1, %c0_10, %c0_11] : memref<4x16x128xbf16, #tpu.memory_space<vmem>>, vector<1x16x128xbf16>
    %10 = vector.shape_cast %9 : vector<1x16x128xbf16> to vector<16x128xbf16>
    %cst_12 = arith.constant dense<0.000000e+00> : vector<9x128xf32>
    %11 = tpu.matmul %8, %10, %cst_12 {dimension_numbers = #tpu.dot_dimension_numbers<[1], [0], [0], [1], [0, 0, 1, 1], [], []>} : vector<9x16xbf16>, vector<16x128xbf16>, vector<9x128xf32> -> vector<9x128xf32>
    %12 = arith.addf %7, %11 : vector<9x128xf32>
    %13 = vector.extract_strided_slice %3 {offsets = [0, 0], sizes = [9, 16], strides = [1, 1]} : vector<10x16xbf16> to vector<9x16xbf16>
    %c2 = arith.constant 2 : index
    %c0_13 = arith.constant 0 : index
    %c0_14 = arith.constant 0 : index
    %14 = vector.load %arg4[%c2, %c0_13, %c0_14] : memref<4x16x128xbf16, #tpu.memory_space<vmem>>, vector<1x16x128xbf16>
    %15 = vector.shape_cast %14 : vector<1x16x128xbf16> to vector<16x128xbf16>
    %cst_15 = arith.constant dense<0.000000e+00> : vector<9x128xf32>
    %16 = tpu.matmul %13, %15, %cst_15 {dimension_numbers = #tpu.dot_dimension_numbers<[1], [0], [0], [1], [0, 0, 1, 1], [], []>} : vector<9x16xbf16>, vector<16x128xbf16>, vector<9x128xf32> -> vector<9x128xf32>
    %17 = arith.addf %12, %16 : vector<9x128xf32>
    %18 = vector.extract_strided_slice %3 {offsets = [1, 0], sizes = [9, 16], strides = [1, 1]} : vector<10x16xbf16> to vector<9x16xbf16>
    %c3 = arith.constant 3 : index
    %c0_16 = arith.constant 0 : index
    %c0_17 = arith.constant 0 : index
    %19 = vector.load %arg4[%c3, %c0_16, %c0_17] : memref<4x16x128xbf16, #tpu.memory_space<vmem>>, vector<1x16x128xbf16>
    %20 = vector.shape_cast %19 : vector<1x16x128xbf16> to vector<16x128xbf16>
    %cst_18 = arith.constant dense<0.000000e+00> : vector<9x128xf32>
    %21 = tpu.matmul %18, %20, %cst_18 {dimension_numbers = #tpu.dot_dimension_numbers<[1], [0], [0], [1], [0, 0, 1, 1], [], []>} : vector<9x16xbf16>, vector<16x128xbf16>, vector<9x128xf32> -> vector<9x128xf32>
    %22 = arith.addf %17, %21 : vector<9x128xf32>
    %c0_19 = arith.constant 0 : index
    %c0_20 = arith.constant 0 : index
    %23 = vector.load %arg5[%c0_19, %c0_20] : memref<1x128xf32, #tpu.memory_space<vmem>>, vector<1x128xf32>
    %24 = vector.broadcast %23 : vector<1x128xf32> to vector<9x128xf32>
    %25 = arith.addf %22, %24 : vector<9x128xf32>
    %26 = math.tanh %25 : vector<9x128xf32>
    %c0_21 = arith.constant 0 : index
    %c0_22 = arith.constant 0 : index
    %c0_23 = arith.constant 0 : index
    %c0_24 = arith.constant 0 : index
    %27 = vector.load %arg6[%c0_21, %c0_22, %c0_23, %c0_24] : memref<1x1x9x128xf32, #tpu.memory_space<vmem>>, vector<1x1x9x128xf32>
    %28 = vector.shape_cast %27 : vector<1x1x9x128xf32> to vector<9x128xf32>
    %29 = vector.shape_cast %26 : vector<9x128xf32> to vector<1x1x9x128xf32>
    tpu.vector_store %arg6[%c0_21, %c0_22, %c0_23, %c0_24], %29 {strides = array<i32>} : memref<1x1x9x128xf32, #tpu.memory_space<vmem>>, vector<1x1x9x128xf32>,
    return
  }
  func.func @transform_0(%arg0: i32, %arg1: i32) -> (i32, i32, i32, i32) {
    %c0_i32 = arith.constant 0 : i32
    %c0_i32_0 = arith.constant 0 : i32
    %c0_i32_1 = arith.constant 0 : i32
    return %arg0, %arg1, %c0_i32, %c0_i32_0 : i32, i32, i32, i32
  }
  func.func @transform_1(%arg0: i32, %arg1: i32) -> (i32, i32, i32, i32) {
    %c1_i32 = arith.constant 1 : i32
    %0 = arith.addi %arg1, %c1_i32 : i32
    %c0_i32 = arith.constant 0 : i32
    %c0_i32_0 = arith.constant 0 : i32
    %c0_i32_1 = arith.constant 0 : i32
    return %arg0, %0, %c0_i32, %c0_i32_0 : i32, i32, i32, i32
  }
  func.func @transform_2(%arg0: i32, %arg1: i32) -> (i32, i32, i32) {
    %c0_i32 = arith.constant 0 : i32
    %c0_i32_0 = arith.constant 0 : i32
    %c0_i32_1 = arith.constant 0 : i32
    %c0_i32_2 = arith.constant 0 : i32
    return %c0_i32, %c0_i32_0, %c0_i32_1 : i32, i32, i32
  }
  func.func @transform_3(%arg0: i32, %arg1: i32) -> (i32, i32) {
    %c0_i32 = arith.constant 0 : i32
    %c0_i32_0 = arith.constant 0 : i32
    %c0_i32_1 = arith.constant 0 : i32
    return %c0_i32, %c0_i32_0 : i32, i32
  }
  func.func @transform_4(%arg0: i32, %arg1: i32) -> (i32, i32, i32, i32) {
    %c0_i32 = arith.constant 0 : i32
    %c0_i32_0 = arith.constant 0 : i32
    %c0_i32_1 = arith.constant 0 : i32
    return %arg0, %arg1, %c0_i32, %c0_i32_0 : i32, i32, i32, i32
  }
}

</mosaic_0001>

<llo_original>
// kernel: tile.28
$region0: #{tile.28}
  #allocation0 [shape = 's32[1]{0}', space=sflag, size = 0x4, scoped, tag = 'scoped memory for tile.28']
  %s0 = inlined_call_operand.vmem [shape: f32[32], index: 0, kind: input, shape index: {}]
  %s1 = inlined_call_operand.vmem [shape: f32[4,32], index: 1, kind: output, shape index: {}]
  // Predicated region
  $region2: #{tile.28} parent=0 // pred_check
    _
  $region3: #{tile.28} parent=0 // pred_check_branch
    %3 = sbr.rel (0) target = $region5
  $region4: #{tile.28} parent=0 // pred_region
    _
  $region5: #{tile.28} parent=0 // pred_fallthru
    _
  %v4 = vld [vmem:[%s0] ss:$0 sm:$0xff]
  %5 = vst [vmem:[%s1] sm:$0xf] %v4

// kernel: tile.38
$region0: #{tile.38}
  #allocation0 [shape = 's32[1]{0}', space=sflag, size = 0x4, scoped, tag = 'scoped memory for tile.38']
  %s0 = inlined_call_operand.vmem [shape: f32[16], index: 0, kind: input, shape index: {}]
  %s1 = inlined_call_operand.vmem [shape: f32[4,16], index: 1, kind: output, shape index: {}]
  // Predicated region
  $region2: #{tile.38} parent=0 // pred_check
    _
  $region3: #{tile.38} parent=0 // pred_check_branch
    %3 = sbr.rel (0) target = $region5
  $region4: #{tile.38} parent=0 // pred_region
    _
  $region5: #{tile.38} parent=0 // pred_fallthru
    _
  %v4 = vld [vmem:[%s0] ss:$0 sm:$0xff]
  %5 = vst [vmem:[%s1] sm:$0xf] %v4

// kernel: tile.39
$region0: #{tile.39}
  %s0 = inlined_call_operand.vmem [shape: f32[4,16], index: 0, kind: input, shape index: {}]
  %s1 = inlined_call_operand.vmem [shape: f32[64], index: 1, kind: output, shape index: {}]
  $region1: #{tile.39} parent=0
    #allocation0 [shape = 'u8[4096]{0}', space=vmem, size = 0x1000, scoped, tag = 'scoped mem for output reshape']
    #allocation1 [shape = 'u8[4096]{0}', space=vmem, size = 0x1000, scoped, tag = 'scoped mem for input reshape']
    %s3 = ssub.s32 16, 1
    %v4 = vld [vmem:[%s0] sm:%s3]
    %5 = vst [vmem:[#allocation1] sm:%s3] %v4
    %v6 = vld [vmem:[#allocation1] sm:$0x1]
    %vm7 = vcmask 130048
    %8 = vst.msk [vmem:[#allocation0] sm:$0x1] %vm7, %v6
    %s9 = scalar_lea.vmem [#allocation1], 3
    %v10 = vld [vmem:[%s9] sm:$0x1]
    %11 = vrot.lane.b32.xlu0 %v10, 48
    %v12 = vpop.permute.xlu0 %11
    %vm13 = vcmask 523648
    %14 = vst.msk [vmem:[#allocation0] sm:$0x1] %vm13, %v12
    %s15 = scalar_lea.vmem [#allocation1], 2
    %v16 = vld [vmem:[%s15] sm:$0x1]
    %17 = vrot.lane.b32.xlu0 %v16, 32
    %v18 = vpop.permute.xlu0 %17
    %vm19 = vcmask 392448
    %20 = vst.msk [vmem:[#allocation0] sm:$0x1] %vm19, %v18
    %s21 = scalar_lea.vmem [#allocation1], 1
    %v22 = vld [vmem:[%s21] sm:$0x1]
    %23 = vrot.lane.b32.xlu0 %v22, 16
    %v24 = vpop.permute.xlu0 %23
    %vm25 = vcmask 261248
    %26 = vst.msk [vmem:[#allocation0] sm:$0x1] %vm25, %v24
    %s28 = ssub.s32 2, 1
    %v29 = vld [vmem:[#allocation0] sm:%s28]
    %s31 = ssub.s32 2, 1
    %32 = vst [vmem:[%s1] sm:%s31] %v29

// kernel: generator_forward.6
$region0: #{generator_forward.6}
  #allocation0 [shape = 'u32[]', space=smem, size = 0x4, offset = 0x4, fixed_abs, tag = 'smem constant byte address 0x4 - core index']
  #allocation1 [shape = 'u32[72,128]{1,0:T(1,128)}', space=vmem, size = 0x9000, scoped, tag = 'internal scratch']
  %s0 = inlined_call_operand.vmem [shape: f32[4,2,128], index: 0, kind: input, shape index: {}]
  %s1 = inlined_call_operand.vmem [shape: f32[1,1,128], index: 1, kind: input, shape index: {}]
  %s2 = inlined_call_operand.vmem [shape: f32[1,1,128], index: 2, kind: input, shape index: {}]
  %s3 = inlined_call_operand.vmem [shape: bf16[4,2,128], index: 3, kind: output, shape index: {}]
  %s4 = sld [smem:[#allocation0]]
  $region22: #{generator_forward.6} parent=0
    _
  %s6 = ssub.s32 1, %s4
  %s7 = scalar_select 0, %s6, %s4
  // Predicated region
  $region2: #{generator_forward.6} parent=0 // pred_check
    _
  $region3: #{generator_forward.6} parent=0 // pred_check_branch
    %9 = sbr.rel (0) target = $region5
  $region4: #{generator_forward.6} parent=0 // pred_region
    _
  $region5: #{generator_forward.6} parent=0 // pred_fallthru
    _
  // Predicated region
  $region6: #{generator_forward.6} parent=0 // pred_check
    _
  $region7: #{generator_forward.6} parent=0 // pred_check_branch
    %11 = sbr.rel (0) target = $region9
  $region8: #{generator_forward.6} parent=0 // pred_region
    _
  $region9: #{generator_forward.6} parent=0 // pred_fallthru
    _
  // Predicated region
  $region10: #{generator_forward.6} parent=0 // pred_check
    _
  $region11: #{generator_forward.6} parent=0 // pred_check_branch
    %13 = sbr.rel (0) target = $region13
  $region12: #{generator_forward.6} parent=0 // pred_region
    _
  $region13: #{generator_forward.6} parent=0 // pred_fallthru
    _
  %v14 = vld [vmem:[%s0] sm:$0x3]
  %v15 = vld [vmem:[%s0 + $0x2] sm:$0x3]
  %v16 = vld [vmem:[%s0 + $0x4] sm:$0x3]
  %v17 = vld [vmem:[%s0 + $0x6] sm:$0x3]
  %v18 = vld [vmem:[%s1] sm:$0x1]
  %v20 = vperm.slane %v18, 0
  %v22 = vmul.f32 %v14, %v20
  %v23 = vmul.f32 %v15, %v20
  %v24 = vmul.f32 %v16, %v20
  %v25 = vmul.f32 %v17, %v20
  %v26 = vld [vmem:[%s2] sm:$0x1]
  %v28 = vperm.slane %v26, 0
  %v30 = vadd.f32 %v22, %v28
  %v31 = vadd.f32 %v23, %v28
  %v32 = vadd.f32 %v24, %v28
  %v33 = vadd.f32 %v25, %v28
  %v34 = vmax.f32 %v30, 0.0
  %v35 = vmax.f32 %v31, 0.0
  %v36 = vmax.f32 %v32, 0.0
  %v37 = vmax.f32 %v33, 0.0
  %v38 = vpack.c.bf16 %v34, %v34
  %v39 = vpack.c.bf16 %v35, %v35
  %v40 = vpack.c.bf16 %v36, %v36
  %v41 = vpack.c.bf16 %v37, %v37
  %42 = vst [vmem:[%s3] sm:$0x1] %v38
  %43 = vst [vmem:[%s3 + $0x1] sm:$0x1] %v39
  %44 = vst [vmem:[%s3 + $0x2] sm:$0x1] %v40
  %45 = vst [vmem:[%s3 + $0x3] sm:$0x1] %v41
  // Predicated region
  $region14: #{generator_forward.6} parent=0 // pred_check
    _
  $region15: #{generator_forward.6} parent=0 // pred_check_branch
    %47 = sbr.rel (0) target = $region17
  $region16: #{generator_forward.6} parent=0 // pred_region
    _
  $region17: #{generator_forward.6} parent=0 // pred_fallthru
    _
  // Predicated region
  $region18: #{generator_forward.6} parent=0 // pred_check
    _
  $region19: #{generator_forward.6} parent=0 // pred_check_branch
    %49 = sbr.rel (0) target = $region21
  $region20: #{generator_forward.6} parent=0 // pred_region
    _
  $region21: #{generator_forward.6} parent=0 // pred_fallthru
    _

// kernel: generator_forward.5
$region0: #{generator_forward.5}
  #allocation0 [shape = 'u32[]', space=smem, size = 0x4, offset = 0x4, fixed_abs, tag = 'smem constant byte address 0x4 - core index']
  #allocation1 [shape = 'u32[72,128]{1,0:T(1,128)}', space=vmem, size = 0x9000, scoped, tag = 'internal scratch']
  %s0 = inlined_call_operand.vmem [shape: bf16[2,3,3,16], index: 0, kind: input, shape index: {}, may-alias: {0,1}]
  %s1 = inlined_call_operand.vmem [shape: bf16[2,3,3,16], index: 1, kind: input, shape index: {}, may-alias: {0,1}]
  %s2 = inlined_call_operand.hbm [shape: bf16[4,16,128], index: 2, kind: input, shape index: {}]
  %s3 = inlined_call_operand.vmem [shape: f32[1,128], index: 3, kind: input, shape index: {}]
  %s4 = inlined_call_operand.vmem [shape: s32[2,128], index: 4, kind: input, shape index: {}]
  %s5 = inlined_call_operand.vmem [shape: f32[2,2,2,128], index: 5, kind: output, shape index: {0}]
  %s6 = inlined_call_operand.vmem [shape: f32[2,8,128], index: 6, kind: output, shape index: {1}]
  %7 = xla_tuple %s5, %s6
  %s8 = sld [smem:[#allocation0]]
  $region69: #{generator_forward.5} parent=0
    _
  %s10 = ssub.s32 1, %s8
  %s11 = scalar_select 0, %s10, %s8
  $region1: #{generator_forward.5} parent=0
    #allocation2 [shape = 'u8[16384]{0}', space=vmem, size = 0x4000, scoped, tag = 'input window, operand 2, single buffered']
    #allocation3 [shape = 's32[2]{0}', space=sflag, size = 0x8, scoped, tag = 'scoped memory for generator_forward.5']
    %12 = vsyncpa [#allocation3], 0
    loop: start=0, step=1, limit=6
    $region2: #{generator_forward.5} parent=1 // loop_pre_header
      _
    $region3: #{generator_forward.5} parent=1 // loop_header
      %s14 = sphi 0, %s18
      %p15 = scmp.ge.s32.totalorder %s14, 6
      %s21 = sphi 0, %s33
      %s22 = sphi 0, %s29
      %s23 = sphi 0, %s21
      %s24 = sphi 0, %s22
      %s25 = sphi 0, %s23
      %s26 = sphi 0, %s24
      %s38 = sphi 0, %s40
      %s41 = sphi 0, %s38
      %s42 = sphi 0, %s41
      %s58 = sphi 0, %s42
      %s68 = sphi 0, %s70
      %s71 = sphi 0, %s68
      %s72 = sphi 0, %s71
      %s88 = sphi 0, %s72
      %s92 = sphi 0, %s92
      %s94 = sphi 0, %s92
      %s95 = sphi 0, %s94
      %s109 = sphi 0, %s95
      %s113 = sphi 0, %s113
      %s115 = sphi 0, %s113
      %s116 = sphi 0, %s115
      %s130 = sphi 0, %s116
      %s134 = sphi 0, %s134
      %s136 = sphi 0, %s134
      %s137 = sphi 0, %s136
      %s151 = sphi 0, %s137
      %s159 = sphi 0, %s161
      %s162 = sphi 0, %s159
      %s163 = sphi 0, %s162
      %s179 = sphi 0, %s163
      %s185 = sphi 0, %s187
      %s188 = sphi 0, %s185
      %s189 = sphi 0, %s188
      %s205 = sphi 0, %s189
    $region4: #{generator_forward.5} parent=1 // loop_header_branch
      %17 = sbr.rel (%p15) target = $region8
    $region5: #{generator_forward.5} parent=1 // loop_body
      %s19 = ssub.s32 %s14, 1
      %s20 = ssub.s32 %s14, 2
      %s27 = sadd.s32 1, %s22
      %p28 = scmp.ge.s32.totalorder %s27, 2
      %s29 = scalar_select %p28, 0, %s27
      %s30 = sadd.s32 1, %s21
      %s31 = scalar_select %p28, %s30, %s21
      %p32 = scmp.ge.s32.totalorder %s31, 2
      %s33 = scalar_select %p32, 0, %s31
      %s34 = ssub.s32 %s21, %s33
      %s35 = ssub.s32 %s22, %s29
      %s36 = sor.u32 %s34, %s35
      %p37 = scmp.eq.s32.totalorder %s36, 0
      %s39 = sadd.s32 %s38, 1
      %s40 = scalar_select %p37, %s38, %s39
      %p43 = pneg %p37
      %p44 = scmp.eq.s32.totalorder %s14, 3
      %p45 = por %p43, %p44
      %p46 = scmp.ne.s32.totalorder %s38, %s41
      %p47 = scmp.eq.s32.totalorder %s14, 0
      %p48 = por %p46, %p47
      %p49 = scmp.ne.s32.totalorder %s38, %s41
      %p50 = scmp.eq.s32.totalorder %s19, 3
      %p51 = por %p49, %p50
      %p52 = scmp.ne.s32.totalorder %s41, %s42
      %p53 = scmp.eq.s32.totalorder %s19, 0
      %p54 = por %p52, %p53
      %p55 = scmp.ne.s32.totalorder %s41, %s42
      %p56 = scmp.eq.s32.totalorder %s20, 3
      %p57 = por %p55, %p56
      %p59 = scmp.ne.s32.totalorder %s42, %s58
      %p60 = scmp.eq.s32.totalorder %s20, 0
      %p61 = por %p59, %p60
      %s62 = sadd.s32 %s22, 1
      %s63 = sadd.s32 %s29, 1
      %s64 = ssub.s32 %s21, %s33
      %s65 = ssub.s32 %s62, %s63
      %s66 = sor.u32 %s64, %s65
      %p67 = scmp.eq.s32.totalorder %s66, 0
      %s69 = sadd.s32 %s68, 1
      %s70 = scalar_select %p67, %s68, %s69
      %p73 = pneg %p67
      %p74 = scmp.eq.s32.totalorder %s14, 3
      %p75 = por %p73, %p74
      %p76 = scmp.ne.s32.totalorder %s68, %s71
      %p77 = scmp.eq.s32.totalorder %s14, 0
      %p78 = por %p76, %p77
      %p79 = scmp.ne.s32.totalorder %s68, %s71
      %p80 = scmp.eq.s32.totalorder %s19, 3
      %p81 = por %p79, %p80
      %p82 = scmp.ne.s32.totalorder %s71, %s72
      %p83 = scmp.eq.s32.totalorder %s19, 0
      %p84 = por %p82, %p83
      %p85 = scmp.ne.s32.totalorder %s71, %s72
      %p86 = scmp.eq.s32.totalorder %s20, 3
      %p87 = por %p85, %p86
      %p89 = scmp.ne.s32.totalorder %s72, %s88
      %p90 = scmp.eq.s32.totalorder %s20, 0
      %p91 = por %p89, %p90
      %s93 = sadd.s32 %s92, 1
      %p96 = scmp.eq.s32.totalorder %s14, 3
      %p97 = scmp.ne.s32.totalorder %s92, %s94
      %p98 = scmp.eq.s32.totalorder %s14, 0
      %p99 = por %p97, %p98
      %p100 = scmp.ne.s32.totalorder %s92, %s94
      %p101 = scmp.eq.s32.totalorder %s19, 3
      %p102 = por %p100, %p101
      %p103 = scmp.ne.s32.totalorder %s94, %s95
      %p104 = scmp.eq.s32.totalorder %s19, 0
      %p105 = por %p103, %p104
      %p106 = scmp.ne.s32.totalorder %s94, %s95
      %p107 = scmp.eq.s32.totalorder %s20, 3
      %p108 = por %p106, %p107
      %p110 = scmp.ne.s32.totalorder %s95, %s109
      %p111 = scmp.eq.s32.totalorder %s20, 0
      %p112 = por %p110, %p111
      %s114 = sadd.s32 %s113, 1
      %p117 = scmp.eq.s32.totalorder %s14, 3
      %p118 = scmp.ne.s32.totalorder %s113, %s115
      %p119 = scmp.eq.s32.totalorder %s14, 0
      %p120 = por %p118, %p119
      %p121 = scmp.ne.s32.totalorder %s113, %s115
      %p122 = scmp.eq.s32.totalorder %s19, 3
      %p123 = por %p121, %p122
      %p124 = scmp.ne.s32.totalorder %s115, %s116
      %p125 = scmp.eq.s32.totalorder %s19, 0
      %p126 = por %p124, %p125
      %p127 = scmp.ne.s32.totalorder %s115, %s116
      %p128 = scmp.eq.s32.totalorder %s20, 3
      %p129 = por %p127, %p128
      %p131 = scmp.ne.s32.totalorder %s116, %s130
      %p132 = scmp.eq.s32.totalorder %s20, 0
      %p133 = por %p131, %p132
      %s135 = sadd.s32 %s134, 1
      %p138 = scmp.eq.s32.totalorder %s14, 3
      %p139 = scmp.ne.s32.totalorder %s134, %s136
      %p140 = scmp.eq.s32.totalorder %s14, 0
      %p141 = por %p139, %p140
      %p142 = scmp.ne.s32.totalorder %s134, %s136
      %p143 = scmp.eq.s32.totalorder %s19, 3
      %p144 = por %p142, %p143
      %p145 = scmp.ne.s32.totalorder %s136, %s137
      %p146 = scmp.eq.s32.totalorder %s19, 0
      %p147 = por %p145, %p146
      %p148 = scmp.ne.s32.totalorder %s136, %s137
      %p149 = scmp.eq.s32.totalorder %s20, 3
      %p150 = por %p148, %p149
      %p152 = scmp.ne.s32.totalorder %s137, %s151
      %p153 = scmp.eq.s32.totalorder %s20, 0
      %p154 = por %p152, %p153
      %s155 = ssub.s32 %s21, %s33
      %s156 = ssub.s32 %s22, %s29
      %s157 = sor.u32 %s155, %s156
      %p158 = scmp.eq.s32.totalorder %s157, 0
      %s160 = sadd.s32 %s159, 1
      %s161 = scalar_select %p158, %s159, %s160
      %p164 = pneg %p158
      %p165 = scmp.eq.s32.totalorder %s14, 3
      %p166 = por %p164, %p165
      %p167 = scmp.ne.s32.totalorder %s159, %s162
      %p168 = scmp.eq.s32.totalorder %s14, 0
      %p169 = por %p167, %p168
      %p170 = scmp.ne.s32.totalorder %s159, %s162
      %p171 = scmp.eq.s32.totalorder %s19, 3
      %p172 = por %p170, %p171
      %p173 = scmp.ne.s32.totalorder %s162, %s163
      %p174 = scmp.eq.s32.totalorder %s19, 0
      %p175 = por %p173, %p174
      %p176 = scmp.ne.s32.totalorder %s162, %s163
      %p177 = scmp.eq.s32.totalorder %s20, 3
      %p178 = por %p176, %p177
      %p180 = scmp.ne.s32.totalorder %s163, %s179
      %p181 = scmp.eq.s32.totalorder %s20, 0
      %p182 = por %p180, %p181
      %s183 = ssub.s32 %s21, %s33
      %p184 = scmp.eq.s32.totalorder %s183, 0
      %s186 = sadd.s32 %s185, 1
      %s187 = scalar_select %p184, %s185, %s186
      %p190 = pneg %p184
      %p191 = scmp.eq.s32.totalorder %s14, 3
      %p192 = por %p190, %p191
      %p193 = scmp.ne.s32.totalorder %s185, %s188
      %p194 = scmp.eq.s32.totalorder %s14, 0
      %p195 = por %p193, %p194
      %p196 = scmp.ne.s32.totalorder %s185, %s188
      %p197 = scmp.eq.s32.totalorder %s19, 3
      %p198 = por %p196, %p197
      %p199 = scmp.ne.s32.totalorder %s188, %s189
      %p200 = scmp.eq.s32.totalorder %s19, 0
      %p201 = por %p199, %p200
      %p202 = scmp.ne.s32.totalorder %s188, %s189
      %p203 = scmp.eq.s32.totalorder %s20, 3
      %p204 = por %p202, %p203
      %p206 = scmp.ne.s32.totalorder %s189, %s205
      %p207 = scmp.eq.s32.totalorder %s20, 0
      %p208 = por %p206, %p207
      %p209 = scmp.le.s32.totalorder 1, %s14
      %p210 = scmp.lt.s32.totalorder %s14, 5
      %p211 = pnand %p209, %p210
      %p212 = pneg %p211
      // Predicated region
      $region9: #{generator_forward.5} parent=5 // pred_check
        _
      $region10: #{generator_forward.5} parent=5 // pred_check_branch
        %214 = sbr.rel (%p211) target = $region12
      $region11: #{generator_forward.5} parent=5 // pred_region
        %s215 = ssub.s32 %s14, 1
        // Predicated region
        $region13: #{generator_forward.5} parent=11 // pred_check
          %p216 = pneg %p105
        $region14: #{generator_forward.5} parent=11 // pred_check_branch
          %218 = sbr.rel (%p216) target = $region16
        $region15: #{generator_forward.5} parent=11 // pred_region
          %220 = vsyncadd [#allocation3], 0
          %s221 = sshll.u32 %s2, 4
          %s222 = int_to_ptr.hbm [resolvable:$true] %s221
          %s223 = sshll.u32 [#allocation2], 4
          %s224 = int_to_ptr.vmem [resolvable:$true] %s223
          %229 = dma.hbm_to_vmem [thread:$0]  %s222, 512, %s224, [#allocation3], 64, 64, 4
        $region16: #{generator_forward.5} parent=11 // pred_fallthru
          _
        // Predicated region
        $region17: #{generator_forward.5} parent=11 // pred_check
          %p230 = pneg %p126
        $region18: #{generator_forward.5} parent=11 // pred_check_branch
          %232 = sbr.rel (%p230) target = $region20
        $region19: #{generator_forward.5} parent=11 // pred_region
          _
        $region20: #{generator_forward.5} parent=11 // pred_fallthru
          _
        // Predicated region
        $region21: #{generator_forward.5} parent=11 // pred_check
          %p233 = pneg %p147
        $region22: #{generator_forward.5} parent=11 // pred_check_branch
          %235 = sbr.rel (%p233) target = $region24
        $region23: #{generator_forward.5} parent=11 // pred_region
          _
        $region24: #{generator_forward.5} parent=11 // pred_fallthru
          _
      $region12: #{generator_forward.5} parent=5 // pred_fallthru
        _
      %p236 = scmp.lt.s32.totalorder %s14, 4
      // Predicated region
      $region25: #{generator_forward.5} parent=5 // pred_check
        %p237 = pneg %p236
      $region26: #{generator_forward.5} parent=5 // pred_check_branch
        %239 = sbr.rel (%p237) target = $region28
      $region27: #{generator_forward.5} parent=5 // pred_region
        // Predicated region
        $region29: #{generator_forward.5} parent=27 // pred_check
          %p240 = pneg %p48
        $region30: #{generator_forward.5} parent=27 // pred_check_branch
          %242 = sbr.rel (%p240) target = $region32
        $region31: #{generator_forward.5} parent=27 // pred_region
          %p243 = scmp.lt.s32.totalorder %s21, 1
          %s244 = scalar_select %p243, %s21, 1
          %p245 = scmp.lt.s32.totalorder %s22, 2
          %s246 = scalar_select %p245, %s22, 2
          %s247 = smul.addr %s244, 3
          %s248 = sadd.s32 %s246, %s247
          %s249 = smul.addr %s248, 2
          %s250 = scalar_lea.vmem %s0, %s249
        $region32: #{generator_forward.5} parent=27 // pred_fallthru
          _
        // Predicated region
        $region33: #{generator_forward.5} parent=27 // pred_check
          %p251 = pneg %p78
        $region34: #{generator_forward.5} parent=27 // pred_check_branch
          %253 = sbr.rel (%p251) target = $region36
        $region35: #{generator_forward.5} parent=27 // pred_region
          %s254 = sadd.s32 %s22, 1
          %p255 = scmp.lt.s32.totalorder %s21, 1
          %s256 = scalar_select %p255, %s21, 1
          %p257 = scmp.lt.s32.totalorder %s254, 2
          %s258 = scalar_select %p257, %s254, 2
          %s259 = smul.addr %s256, 3
          %s260 = sadd.s32 %s258, %s259
          %s261 = smul.addr %s260, 2
          %s262 = scalar_lea.vmem %s1, %s261
          %s263 = sadd.s32 %s22, 1
        $region36: #{generator_forward.5} parent=27 // pred_fallthru
          _
      $region28: #{generator_forward.5} parent=5 // pred_fallthru
        _
      %p264 = scmp.le.s32.totalorder 1, %s14
      %p265 = scmp.lt.s32.totalorder %s14, 5
      %p266 = pnand %p264, %p265
      %p267 = pneg %p266
      // Predicated region
      $region37: #{generator_forward.5} parent=5 // pred_check
        _
      $region38: #{generator_forward.5} parent=5 // pred_check_branch
        %269 = sbr.rel (%p266) target = $region40
      $region39: #{generator_forward.5} parent=5 // pred_region
        %s270 = ssub.s32 %s14, 1
        // Predicated region
        $region41: #{generator_forward.5} parent=39 // pred_check
          %p271 = pneg %p105
        $region42: #{generator_forward.5} parent=39 // pred_check_branch
          %273 = sbr.rel (%p271) target = $region44
        $region43: #{generator_forward.5} parent=39 // pred_region
          %275 = dma.done [#allocation3], 512
        $region44: #{generator_forward.5} parent=39 // pred_fallthru
          _
        %p276 = scmp.lt.s32.totalorder %s23, 1
        %s277 = scalar_select %p276, %s23, 1
        %p278 = scmp.lt.s32.totalorder %s24, 2
        %s279 = scalar_select %p278, %s24, 2
        %s280 = smul.addr %s277, 3
        %s281 = sadd.s32 %s279, %s280
        %s282 = smul.addr %s281, 2
        %s283 = scalar_lea.vmem %s0, %s282
        %p284 = pneg %p54
        %p285 = pneg %p51
        %s286 = sadd.s32 %s24, 1
        %p287 = scmp.lt.s32.totalorder %s23, 1
        %s288 = scalar_select %p287, %s23, 1
        %p289 = scmp.lt.s32.totalorder %s286, 2
        %s290 = scalar_select %p289, %s286, 2
        %s291 = smul.addr %s288, 3
        %s292 = sadd.s32 %s290, %s291
        %s293 = smul.addr %s292, 2
        %s294 = scalar_lea.vmem %s1, %s293
        %p295 = pneg %p84
        %p296 = pneg %p81
        %p297 = pneg %p105
        %p298 = pneg %p102
        %p299 = pneg %p126
        %p300 = pneg %p123
        %p301 = pneg %p147
        %p302 = pneg %p144
        %p303 = pneg %p175
        %p304 = pneg %p172
        %p305 = scmp.lt.s32.totalorder %s23, 1
        %s306 = scalar_select %p305, %s23, 1
        %p307 = scmp.lt.s32.totalorder %s24, 1
        %s308 = scalar_select %p307, %s24, 1
        %s309 = smul.addr %s306, 2
        %s310 = sadd.s32 %s308, %s309
        %s311 = smul.addr %s310, 2
        %s312 = scalar_lea.vmem %s5, %s311
        %p313 = pneg %p201
        %p314 = pneg %p198
        %p315 = scmp.lt.s32.totalorder %s23, 1
        %s316 = scalar_select %p315, %s23, 1
        %s317 = smul.addr %s316, 8
        %s318 = scalar_lea.vmem %s6, %s317
        %p319 = scmp.lt.s32.totalorder %s23, 1
        %s320 = scalar_select %p319, %s23, 1
        %p321 = scmp.lt.s32.totalorder %s24, 2
        %s322 = scalar_select %p321, %s24, 2
        %s323 = smul.addr %s320, 3
        %s324 = sadd.s32 %s322, %s323
        %s325 = smul.addr %s324, 2
        %s326 = scalar_lea.vmem %s0, %s325
        %s327 = sadd.s32 %s24, 1
        %p328 = scmp.lt.s32.totalorder %s23, 1
        %s329 = scalar_select %p328, %s23, 1
        %p330 = scmp.lt.s32.totalorder %s327, 2
        %s331 = scalar_select %p330, %s327, 2
        %s332 = smul.addr %s329, 3
        %s333 = sadd.s32 %s331, %s332
        %s334 = smul.addr %s333, 2
        %s335 = scalar_lea.vmem %s1, %s334
        %s336 = sadd.s32 %s24, 1
        %p337 = scmp.lt.s32.totalorder %s23, 1
        %s338 = scalar_select %p337, %s23, 1
        %p339 = scmp.lt.s32.totalorder %s24, 1
        %s340 = scalar_select %p339, %s24, 1
        %s341 = smul.addr %s338, 2
        %s342 = sadd.s32 %s340, %s341
        %s343 = smul.addr %s342, 2
        %s344 = scalar_lea.vmem %s5, %s343
        %p345 = scmp.lt.s32.totalorder %s23, 1
        %s346 = scalar_select %p345, %s23, 1
        %s347 = smul.addr %s346, 8
        %s348 = scalar_lea.vmem %s6, %s347
        %p350 = scmp.eq.s32.totalorder %s24, 0
        // Predicated region
        $region45: #{generator_forward.5} parent=39 // pred_check
          %p351 = pneg %p350
        $region46: #{generator_forward.5} parent=39 // pred_check_branch
          %353 = sbr.rel (%p351) target = $region48
        $region47: #{generator_forward.5} parent=39 // pred_region
          %354 = vst [vmem:[%s348] sm:$0xff] 0.0
        $region48: #{generator_forward.5} parent=39 // pred_fallthru
          _
        %v355 = vld [vmem:[%s326] sm:$0x3]
        %v356 = vld [vmem:[%s335] sm:$0x3]
        %v357 = vld [vmem:[#allocation2] sm:$0xf]
        %v358 = vld [vmem:[#allocation2 + $0x4] sm:$0xf]
        %s359 = scalar_lea.vmem [#allocation2], 8
        %v360 = vld [vmem:[%s359] sm:$0xf]
        %v361 = vld [vmem:[%s359 + $0x4] sm:$0xf]
        %363 = vst [vmem:[#allocation1] ss:$4 sm:$0xff] %v355
        %v364 = vld.sshfl [vmem:[#allocation1] sm:$0xff pattern:$0x73625140]
        %v365 = vshrl.u32 %v364, 16
        %v367 = vshll.u32 %v364, 16
        %v369 = vrot.slane %v367, 1
        %v370 = vor.u32 %v365, %v369
        %v373 = vunpack.c.l.b16 %v360
        %v374 = vunpack.c.l.b16 %v361
        %v375 = vpack.c.b16 %v374, %v373
        %vm377 = vcmask 130048
        %v379 = vsel %vm377, %v370, 0
        %381 = vmatpush.bf16.msra.mxu0 0
        %382 = vmatpush.bf16.msra.mxu0 0
        %383 = vmatpush.bf16.msra.mxu0 0
        %384 = vmatpush.bf16.msra.mxu0 0
        %385 = vmatpush.bf16.msra.mxu0 0
        %386 = vmatpush.bf16.msra.mxu0 0
        %387 = vmatpush.bf16.msra.mxu0 0
        %388 = vmatpush.bf16.msra.mxu0 %v375
        %389 = vmatmul.bf16.gmra.mxu0 %v379
        %v390 = vpop.f32.mrf.mxu0
        %v391 = vadd.f32 0.0, %v390
        %v392 = vpop.f32.mrf.mxu0
        %393 = vdwg.mxu0
        %v396 = vunpack.c.l.b16 %v357
        %v397 = vunpack.c.l.b16 %v358
        %v398 = vpack.c.b16 %v397, %v396
        %v400 = vsel %vm377, %v355, 0
        %402 = vmatpush.bf16.msra.mxu0 0
        %403 = vmatpush.bf16.msra.mxu0 0
        %404 = vmatpush.bf16.msra.mxu0 0
        %405 = vmatpush.bf16.msra.mxu0 0
        %406 = vmatpush.bf16.msra.mxu0 0
        %407 = vmatpush.bf16.msra.mxu0 0
        %408 = vmatpush.bf16.msra.mxu0 0
        %409 = vmatpush.bf16.msra.mxu0 %v398
        %410 = vmatmul.bf16.gmra.mxu0 %v400
        %v411 = vpop.f32.mrf.mxu0
        %v412 = vadd.f32 %v391, %v411
        %v413 = vpop.f32.mrf.mxu0
        %414 = vdwg.mxu0
        %s415 = scalar_lea.vmem [#allocation2], 16
        %v416 = vld [vmem:[%s415] sm:$0xf]
        %v417 = vld [vmem:[%s415 + $0x4] sm:$0xf]
        %v420 = vunpack.c.l.b16 %v416
        %v421 = vunpack.c.l.b16 %v417
        %v422 = vpack.c.b16 %v421, %v420
        %v425 = vsel %vm377, %v356, 0
        %427 = vmatpush.bf16.msra.mxu0 0
        %428 = vmatpush.bf16.msra.mxu0 0
        %429 = vmatpush.bf16.msra.mxu0 0
        %430 = vmatpush.bf16.msra.mxu0 0
        %431 = vmatpush.bf16.msra.mxu0 0
        %432 = vmatpush.bf16.msra.mxu0 0
        %433 = vmatpush.bf16.msra.mxu0 0
        %434 = vmatpush.bf16.msra.mxu0 %v422
        %435 = vmatmul.bf16.gmra.mxu0 %v425
        %v436 = vpop.f32.mrf.mxu0
        %v437 = vadd.f32 0.0, %v436
        %v438 = vpop.f32.mrf.mxu0
        %439 = vdwg.mxu0
        %v440 = vadd.f32 %v412, %v437
        %s441 = scalar_lea.vmem [#allocation2], 24
        %v442 = vld [vmem:[%s441] sm:$0xf]
        %v443 = vld [vmem:[%s441 + $0x4] sm:$0xf]
        %444 = vst [vmem:[#allocation1] ss:$4 sm:$0xff] %v356
        %v445 = vld.sshfl [vmem:[#allocation1] sm:$0xff pattern:$0x73625140]
        %v446 = vshrl.u32 %v445, 16
        %v448 = vshll.u32 %v445, 16
        %v450 = vrot.slane %v448, 1
        %v451 = vor.u32 %v446, %v450
        %v454 = vunpack.c.l.b16 %v442
        %v455 = vunpack.c.l.b16 %v443
        %v456 = vpack.c.b16 %v455, %v454
        %v459 = vsel %vm377, %v451, 0
        %461 = vmatpush.bf16.msra.mxu0 0
        %462 = vmatpush.bf16.msra.mxu0 0
        %463 = vmatpush.bf16.msra.mxu0 0
        %464 = vmatpush.bf16.msra.mxu0 0
        %465 = vmatpush.bf16.msra.mxu0 0
        %466 = vmatpush.bf16.msra.mxu0 0
        %467 = vmatpush.bf16.msra.mxu0 0
        %468 = vmatpush.bf16.msra.mxu0 %v456
        %469 = vmatmul.bf16.gmra.mxu0 %v459
        %v470 = vpop.f32.mrf.mxu0
        %v471 = vadd.f32 0.0, %v470
        %v472 = vpop.f32.mrf.mxu0
        %473 = vdwg.mxu0
        %v474 = vadd.f32 %v440, %v471
        %v475 = vld [vmem:[%s3] sm:$0x1]
        %v477 = vperm.slane %v475, 0
        %v479 = vadd.f32 %v474, %v477
        %480 = vst [vmem:[%s344] sm:$0x3] %v479
        %v481 = vld [vmem:[%s4] sm:$0x1]
        %v482 = vld [vmem:[%s4 + $0x1] sm:$0x1]
        %v483 = vstv %s24
        %v484 = vsub.s32 %v483, %v481
        %v485 = vlaneseq
        %v486 = vshrl.u32 %v485, 7
        %v487 = vperm.slane %v482, 0
        %v488 = vsub.s32 %v486, %v487
        %vm489 = vcmp.ge.s32.totalorder %v484, 0
        %vm490 = vcmp.lt.s32.totalorder %v484, 2
        %vm491 = vmand %vm489, %vm490
        %vm492 = vcmp.ge.s32.totalorder %v488, 0
        %v493 = vsel %vm491, 1, 0
        %v494 = vperm.slane %v493, 0
        %vm495 = vcmp.eq.s32.totalorder %v494, 1
        %vm496 = vmand %vm495, %vm492
        %vm497 = vcmp.lt.s32.totalorder %v488, 2
        %vm498 = vmand %vm496, %vm497
        %v499 = vsel %vm498, 1, 0
        %v500 = vcvt.s32.f32 %v499
        %v501 = vmul.f32 %v479, %v500
        %v502 = vld [vmem:[%s348] sm:$0x1]
        %vm503 = vcmask 1041408
        %v504 = vsel %vm503, %v501, 0.0
        %v505 = vrot.slane %v504, 4
        %v506 = vadd.f32 %v504, %v505
        %v507 = vrot.slane %v506, 2
        %v508 = vadd.f32 %v506, %v507
        %v509 = vrot.slane %v508, 1
        %v510 = vadd.f32 %v508, %v509
        %v511 = vadd.f32 %v502, %v510
        %512 = vst [vmem:[%s348] sm:$0x1] %v511
        %v513 = vld [vmem:[%s348 + $0x1] sm:$0x1]
        %v514 = vmul.f32 %v501, %v479
        %v515 = vsel %vm503, %v514, 0.0
        %v516 = vrot.slane %v515, 4
        %v517 = vadd.f32 %v515, %v516
        %v518 = vrot.slane %v517, 2
        %v519 = vadd.f32 %v517, %v518
        %v520 = vrot.slane %v519, 1
        %v521 = vadd.f32 %v519, %v520
        %v522 = vadd.f32 %v513, %v521
        %523 = vst [vmem:[%s348 + $0x1] sm:$0x1] %v522
        %p524 = scmp.lt.s32.totalorder %s23, 1
        %s525 = scalar_select %p524, %s23, 1
        %p526 = scmp.lt.s32.totalorder %s24, 1
        %s527 = scalar_select %p526, %s24, 1
        %s528 = smul.addr %s525, 2
        %s529 = sadd.s32 %s527, %s528
        %s530 = smul.addr %s529, 2
        %s531 = scalar_lea.vmem %s5, %s530
        %p532 = scmp.lt.s32.totalorder %s23, 1
        %s533 = scalar_select %p532, %s23, 1
        %s534 = smul.addr %s533, 8
        %s535 = scalar_lea.vmem %s6, %s534
        // Predicated region
        $region49: #{generator_forward.5} parent=39 // pred_check
          %p536 = pneg %p172
        $region50: #{generator_forward.5} parent=39 // pred_check_branch
          %538 = sbr.rel (%p536) target = $region52
        $region51: #{generator_forward.5} parent=39 // pred_region
          _
        $region52: #{generator_forward.5} parent=39 // pred_fallthru
          _
        // Predicated region
        $region53: #{generator_forward.5} parent=39 // pred_check
          %p539 = pneg %p198
        $region54: #{generator_forward.5} parent=39 // pred_check_branch
          %541 = sbr.rel (%p539) target = $region56
        $region55: #{generator_forward.5} parent=39 // pred_region
          _
        $region56: #{generator_forward.5} parent=39 // pred_fallthru
          _
      $region40: #{generator_forward.5} parent=5 // pred_fallthru
        _
      %p542 = scmp.le.s32.totalorder 2, %s14
      // Predicated region
      $region57: #{generator_forward.5} parent=5 // pred_check
        %p543 = pneg %p542
      $region58: #{generator_forward.5} parent=5 // pred_check_branch
        %545 = sbr.rel (%p543) target = $region60
      $region59: #{generator_forward.5} parent=5 // pred_region
        %s546 = ssub.s32 %s14, 2
        // Predicated region
        $region61: #{generator_forward.5} parent=59 // pred_check
          %p547 = pneg %p178
        $region62: #{generator_forward.5} parent=59 // pred_check_branch
          %549 = sbr.rel (%p547) target = $region64
        $region63: #{generator_forward.5} parent=59 // pred_region
          %p550 = scmp.lt.s32.totalorder %s25, 1
          %s551 = scalar_select %p550, %s25, 1
          %p552 = scmp.lt.s32.totalorder %s26, 1
          %s553 = scalar_select %p552, %s26, 1
          %s554 = smul.addr %s551, 2
          %s555 = sadd.s32 %s553, %s554
          %s556 = smul.addr %s555, 2
          %s557 = scalar_lea.vmem %s5, %s556
        $region64: #{generator_forward.5} parent=59 // pred_fallthru
          _
        // Predicated region
        $region65: #{generator_forward.5} parent=59 // pred_check
          %p558 = pneg %p204
        $region66: #{generator_forward.5} parent=59 // pred_check_branch
          %560 = sbr.rel (%p558) target = $region68
        $region67: #{generator_forward.5} parent=59 // pred_region
          %p561 = scmp.lt.s32.totalorder %s25, 1
          %s562 = scalar_select %p561, %s25, 1
          %s563 = smul.addr %s562, 8
          %s564 = scalar_lea.vmem %s6, %s563
        $region68: #{generator_forward.5} parent=59 // pred_fallthru
          _
      $region60: #{generator_forward.5} parent=5 // pred_fallthru
        _
    $region6: #{generator_forward.5} parent=1 // loop_footer
      %s18 = sadd.s32 1, %s14
    $region7: #{generator_forward.5} parent=1 // loop_footer_branch
      %13 = sbr.rel target = $region3
    $region8: #{generator_forward.5} parent=1 // loop_exit
      _
    %565 = vsyncpa [#allocation3], 1
    %s566 = scalar_lea.sflag [#allocation3], 1
    %567 = vsyncpa %s566, 1

// kernel: generator_forward.7
$region0: #{generator_forward.7}
  #allocation0 [shape = 'u32[]', space=smem, size = 0x4, offset = 0x4, fixed_abs, tag = 'smem constant byte address 0x4 - core index']
  #allocation1 [shape = 'u32[72,128]{1,0:T(1,128)}', space=vmem, size = 0x9000, scoped, tag = 'internal scratch']
  %s0 = inlined_call_operand.vmem [shape: bf16[2,6,6,32], index: 0, kind: input, shape index: {}, may-alias: {0,1}]
  %s1 = inlined_call_operand.vmem [shape: bf16[2,6,6,32], index: 1, kind: input, shape index: {}, may-alias: {0,1}]
  %s2 = inlined_call_operand.vmem [shape: bf16[4,32,128], index: 2, kind: input, shape index: {}]
  %s3 = inlined_call_operand.vmem [shape: f32[1,128], index: 3, kind: input, shape index: {}]
  %s4 = inlined_call_operand.vmem [shape: s32[2,128], index: 4, kind: input, shape index: {}]
  %s5 = inlined_call_operand.vmem [shape: f32[2,5,5,128], index: 5, kind: output, shape index: {0}]
  %s6 = inlined_call_operand.vmem [shape: f32[2,8,128], index: 6, kind: output, shape index: {1}]
  %7 = xla_tuple %s5, %s6
  %s8 = sld [smem:[#allocation0]]
  $region65: #{generator_forward.7} parent=0
    _
  %s10 = ssub.s32 1, %s8
  %s11 = scalar_select 0, %s10, %s8
  loop: start=0, step=1, limit=12
  $region2: #{generator_forward.7} parent=0 // loop_pre_header
    _
  $region3: #{generator_forward.7} parent=0 // loop_header
    %s13 = sphi 0, %s17
    %p14 = scmp.ge.s32.totalorder %s13, 12
    %s20 = sphi 0, %s32
    %s21 = sphi 0, %s28
    %s22 = sphi 0, %s20
    %s23 = sphi 0, %s21
    %s24 = sphi 0, %s22
    %s25 = sphi 0, %s23
    %s37 = sphi 0, %s39
    %s40 = sphi 0, %s37
    %s41 = sphi 0, %s40
    %s57 = sphi 0, %s41
    %s67 = sphi 0, %s69
    %s70 = sphi 0, %s67
    %s71 = sphi 0, %s70
    %s87 = sphi 0, %s71
    %s91 = sphi 0, %s91
    %s93 = sphi 0, %s91
    %s94 = sphi 0, %s93
    %s108 = sphi 0, %s94
    %s112 = sphi 0, %s112
    %s114 = sphi 0, %s112
    %s115 = sphi 0, %s114
    %s129 = sphi 0, %s115
    %s133 = sphi 0, %s133
    %s135 = sphi 0, %s133
    %s136 = sphi 0, %s135
    %s150 = sphi 0, %s136
    %s158 = sphi 0, %s160
    %s161 = sphi 0, %s158
    %s162 = sphi 0, %s161
    %s178 = sphi 0, %s162
    %s184 = sphi 0, %s186
    %s187 = sphi 0, %s184
    %s188 = sphi 0, %s187
    %s204 = sphi 0, %s188
  $region4: #{generator_forward.7} parent=0 // loop_header_branch
    %16 = sbr.rel (%p14) target = $region8
  $region5: #{generator_forward.7} parent=0 // loop_body
    %s18 = ssub.s32 %s13, 1
    %s19 = ssub.s32 %s13, 2
    %s26 = sadd.s32 1, %s21
    %p27 = scmp.ge.s32.totalorder %s26, 5
    %s28 = scalar_select %p27, 0, %s26
    %s29 = sadd.s32 1, %s20
    %s30 = scalar_select %p27, %s29, %s20
    %p31 = scmp.ge.s32.totalorder %s30, 2
    %s32 = scalar_select %p31, 0, %s30
    %s33 = ssub.s32 %s20, %s32
    %s34 = ssub.s32 %s21, %s28
    %s35 = sor.u32 %s33, %s34
    %p36 = scmp.eq.s32.totalorder %s35, 0
    %s38 = sadd.s32 %s37, 1
    %s39 = scalar_select %p36, %s37, %s38
    %p42 = pneg %p36
    %p43 = scmp.eq.s32.totalorder %s13, 9
    %p44 = por %p42, %p43
    %p45 = scmp.ne.s32.totalorder %s37, %s40
    %p46 = scmp.eq.s32.totalorder %s13, 0
    %p47 = por %p45, %p46
    %p48 = scmp.ne.s32.totalorder %s37, %s40
    %p49 = scmp.eq.s32.totalorder %s18, 9
    %p50 = por %p48, %p49
    %p51 = scmp.ne.s32.totalorder %s40, %s41
    %p52 = scmp.eq.s32.totalorder %s18, 0
    %p53 = por %p51, %p52
    %p54 = scmp.ne.s32.totalorder %s40, %s41
    %p55 = scmp.eq.s32.totalorder %s19, 9
    %p56 = por %p54, %p55
    %p58 = scmp.ne.s32.totalorder %s41, %s57
    %p59 = scmp.eq.s32.totalorder %s19, 0
    %p60 = por %p58, %p59
    %s61 = sadd.s32 %s21, 1
    %s62 = sadd.s32 %s28, 1
    %s63 = ssub.s32 %s20, %s32
    %s64 = ssub.s32 %s61, %s62
    %s65 = sor.u32 %s63, %s64
    %p66 = scmp.eq.s32.totalorder %s65, 0
    %s68 = sadd.s32 %s67, 1
    %s69 = scalar_select %p66, %s67, %s68
    %p72 = pneg %p66
    %p73 = scmp.eq.s32.totalorder %s13, 9
    %p74 = por %p72, %p73
    %p75 = scmp.ne.s32.totalorder %s67, %s70
    %p76 = scmp.eq.s32.totalorder %s13, 0
    %p77 = por %p75, %p76
    %p78 = scmp.ne.s32.totalorder %s67, %s70
    %p79 = scmp.eq.s32.totalorder %s18, 9
    %p80 = por %p78, %p79
    %p81 = scmp.ne.s32.totalorder %s70, %s71
    %p82 = scmp.eq.s32.totalorder %s18, 0
    %p83 = por %p81, %p82
    %p84 = scmp.ne.s32.totalorder %s70, %s71
    %p85 = scmp.eq.s32.totalorder %s19, 9
    %p86 = por %p84, %p85
    %p88 = scmp.ne.s32.totalorder %s71, %s87
    %p89 = scmp.eq.s32.totalorder %s19, 0
    %p90 = por %p88, %p89
    %s92 = sadd.s32 %s91, 1
    %p95 = scmp.eq.s32.totalorder %s13, 9
    %p96 = scmp.ne.s32.totalorder %s91, %s93
    %p97 = scmp.eq.s32.totalorder %s13, 0
    %p98 = por %p96, %p97
    %p99 = scmp.ne.s32.totalorder %s91, %s93
    %p100 = scmp.eq.s32.totalorder %s18, 9
    %p101 = por %p99, %p100
    %p102 = scmp.ne.s32.totalorder %s93, %s94
    %p103 = scmp.eq.s32.totalorder %s18, 0
    %p104 = por %p102, %p103
    %p105 = scmp.ne.s32.totalorder %s93, %s94
    %p106 = scmp.eq.s32.totalorder %s19, 9
    %p107 = por %p105, %p106
    %p109 = scmp.ne.s32.totalorder %s94, %s108
    %p110 = scmp.eq.s32.totalorder %s19, 0
    %p111 = por %p109, %p110
    %s113 = sadd.s32 %s112, 1
    %p116 = scmp.eq.s32.totalorder %s13, 9
    %p117 = scmp.ne.s32.totalorder %s112, %s114
    %p118 = scmp.eq.s32.totalorder %s13, 0
    %p119 = por %p117, %p118
    %p120 = scmp.ne.s32.totalorder %s112, %s114
    %p121 = scmp.eq.s32.totalorder %s18, 9
    %p122 = por %p120, %p121
    %p123 = scmp.ne.s32.totalorder %s114, %s115
    %p124 = scmp.eq.s32.totalorder %s18, 0
    %p125 = por %p123, %p124
    %p126 = scmp.ne.s32.totalorder %s114, %s115
    %p127 = scmp.eq.s32.totalorder %s19, 9
    %p128 = por %p126, %p127
    %p130 = scmp.ne.s32.totalorder %s115, %s129
    %p131 = scmp.eq.s32.totalorder %s19, 0
    %p132 = por %p130, %p131
    %s134 = sadd.s32 %s133, 1
    %p137 = scmp.eq.s32.totalorder %s13, 9
    %p138 = scmp.ne.s32.totalorder %s133, %s135
    %p139 = scmp.eq.s32.totalorder %s13, 0
    %p140 = por %p138, %p139
    %p141 = scmp.ne.s32.totalorder %s133, %s135
    %p142 = scmp.eq.s32.totalorder %s18, 9
    %p143 = por %p141, %p142
    %p144 = scmp.ne.s32.totalorder %s135, %s136
    %p145 = scmp.eq.s32.totalorder %s18, 0
    %p146 = por %p144, %p145
    %p147 = scmp.ne.s32.totalorder %s135, %s136
    %p148 = scmp.eq.s32.totalorder %s19, 9
    %p149 = por %p147, %p148
    %p151 = scmp.ne.s32.totalorder %s136, %s150
    %p152 = scmp.eq.s32.totalorder %s19, 0
    %p153 = por %p151, %p152
    %s154 = ssub.s32 %s20, %s32
    %s155 = ssub.s32 %s21, %s28
    %s156 = sor.u32 %s154, %s155
    %p157 = scmp.eq.s32.totalorder %s156, 0
    %s159 = sadd.s32 %s158, 1
    %s160 = scalar_select %p157, %s158, %s159
    %p163 = pneg %p157
    %p164 = scmp.eq.s32.totalorder %s13, 9
    %p165 = por %p163, %p164
    %p166 = scmp.ne.s32.totalorder %s158, %s161
    %p167 = scmp.eq.s32.totalorder %s13, 0
    %p168 = por %p166, %p167
    %p169 = scmp.ne.s32.totalorder %s158, %s161
    %p170 = scmp.eq.s32.totalorder %s18, 9
    %p171 = por %p169, %p170
    %p172 = scmp.ne.s32.totalorder %s161, %s162
    %p173 = scmp.eq.s32.totalorder %s18, 0
    %p174 = por %p172, %p173
    %p175 = scmp.ne.s32.totalorder %s161, %s162
    %p176 = scmp.eq.s32.totalorder %s19, 9
    %p177 = por %p175, %p176
    %p179 = scmp.ne.s32.totalorder %s162, %s178
    %p180 = scmp.eq.s32.totalorder %s19, 0
    %p181 = por %p179, %p180
    %s182 = ssub.s32 %s20, %s32
    %p183 = scmp.eq.s32.totalorder %s182, 0
    %s185 = sadd.s32 %s184, 1
    %s186 = scalar_select %p183, %s184, %s185
    %p189 = pneg %p183
    %p190 = scmp.eq.s32.totalorder %s13, 9
    %p191 = por %p189, %p190
    %p192 = scmp.ne.s32.totalorder %s184, %s187
    %p193 = scmp.eq.s32.totalorder %s13, 0
    %p194 = por %p192, %p193
    %p195 = scmp.ne.s32.totalorder %s184, %s187
    %p196 = scmp.eq.s32.totalorder %s18, 9
    %p197 = por %p195, %p196
    %p198 = scmp.ne.s32.totalorder %s187, %s188
    %p199 = scmp.eq.s32.totalorder %s18, 0
    %p200 = por %p198, %p199
    %p201 = scmp.ne.s32.totalorder %s187, %s188
    %p202 = scmp.eq.s32.totalorder %s19, 9
    %p203 = por %p201, %p202
    %p205 = scmp.ne.s32.totalorder %s188, %s204
    %p206 = scmp.eq.s32.totalorder %s19, 0
    %p207 = por %p205, %p206
    %p208 = scmp.le.s32.totalorder 1, %s13
    %p209 = scmp.lt.s32.totalorder %s13, 11
    %p210 = pnand %p208, %p209
    %p211 = pneg %p210
    // Predicated region
    $region9: #{generator_forward.7} parent=5 // pred_check
      _
    $region10: #{generator_forward.7} parent=5 // pred_check_branch
      %213 = sbr.rel (%p210) target = $region12
    $region11: #{generator_forward.7} parent=5 // pred_region
      %s214 = ssub.s32 %s13, 1
      // Predicated region
      $region13: #{generator_forward.7} parent=11 // pred_check
        %p215 = pneg %p104
      $region14: #{generator_forward.7} parent=11 // pred_check_branch
        %217 = sbr.rel (%p215) target = $region16
      $region15: #{generator_forward.7} parent=11 // pred_region
        _
      $region16: #{generator_forward.7} parent=11 // pred_fallthru
        _
      // Predicated region
      $region17: #{generator_forward.7} parent=11 // pred_check
        %p218 = pneg %p125
      $region18: #{generator_forward.7} parent=11 // pred_check_branch
        %220 = sbr.rel (%p218) target = $region20
      $region19: #{generator_forward.7} parent=11 // pred_region
        _
      $region20: #{generator_forward.7} parent=11 // pred_fallthru
        _
      // Predicated region
      $region21: #{generator_forward.7} parent=11 // pred_check
        %p221 = pneg %p146
      $region22: #{generator_forward.7} parent=11 // pred_check_branch
        %223 = sbr.rel (%p221) target = $region24
      $region23: #{generator_forward.7} parent=11 // pred_region
        _
      $region24: #{generator_forward.7} parent=11 // pred_fallthru
        _
    $region12: #{generator_forward.7} parent=5 // pred_fallthru
      _
    %p224 = scmp.lt.s32.totalorder %s13, 10
    // Predicated region
    $region25: #{generator_forward.7} parent=5 // pred_check
      %p225 = pneg %p224
    $region26: #{generator_forward.7} parent=5 // pred_check_branch
      %227 = sbr.rel (%p225) target = $region28
    $region27: #{generator_forward.7} parent=5 // pred_region
      // Predicated region
      $region29: #{generator_forward.7} parent=27 // pred_check
        %p228 = pneg %p47
      $region30: #{generator_forward.7} parent=27 // pred_check_branch
        %230 = sbr.rel (%p228) target = $region32
      $region31: #{generator_forward.7} parent=27 // pred_region
        %p231 = scmp.lt.s32.totalorder %s20, 1
        %s232 = scalar_select %p231, %s20, 1
        %p233 = scmp.lt.s32.totalorder %s21, 5
        %s234 = scalar_select %p233, %s21, 5
        %s235 = smul.addr %s232, 6
        %s236 = sadd.s32 %s234, %s235
        %s237 = smul.addr %s236, 4
        %s238 = scalar_lea.vmem %s0, %s237
      $region32: #{generator_forward.7} parent=27 // pred_fallthru
        _
      // Predicated region
      $region33: #{generator_forward.7} parent=27 // pred_check
        %p239 = pneg %p77
      $region34: #{generator_forward.7} parent=27 // pred_check_branch
        %241 = sbr.rel (%p239) target = $region36
      $region35: #{generator_forward.7} parent=27 // pred_region
        %s242 = sadd.s32 %s21, 1
        %p243 = scmp.lt.s32.totalorder %s20, 1
        %s244 = scalar_select %p243, %s20, 1
        %p245 = scmp.lt.s32.totalorder %s242, 5
        %s246 = scalar_select %p245, %s242, 5
        %s247 = smul.addr %s244, 6
        %s248 = sadd.s32 %s246, %s247
        %s249 = smul.addr %s248, 4
        %s250 = scalar_lea.vmem %s1, %s249
        %s251 = sadd.s32 %s21, 1
      $region36: #{generator_forward.7} parent=27 // pred_fallthru
        _
    $region28: #{generator_forward.7} parent=5 // pred_fallthru
      _
    %p252 = scmp.le.s32.totalorder 1, %s13
    %p253 = scmp.lt.s32.totalorder %s13, 11
    %p254 = pnand %p252, %p253
    %p255 = pneg %p254
    // Predicated region
    $region37: #{generator_forward.7} parent=5 // pred_check
      _
    $region38: #{generator_forward.7} parent=5 // pred_check_branch
      %257 = sbr.rel (%p254) target = $region40
    $region39: #{generator_forward.7} parent=5 // pred_region
      %s258 = ssub.s32 %s13, 1
      %p259 = scmp.lt.s32.totalorder %s22, 1
      %s260 = scalar_select %p259, %s22, 1
      %p261 = scmp.lt.s32.totalorder %s23, 5
      %s262 = scalar_select %p261, %s23, 5
      %s263 = smul.addr %s260, 6
      %s264 = sadd.s32 %s262, %s263
      %s265 = smul.addr %s264, 4
      %s266 = scalar_lea.vmem %s0, %s265
      %p267 = pneg %p53
      %p268 = pneg %p50
      %s269 = sadd.s32 %s23, 1
      %p270 = scmp.lt.s32.totalorder %s22, 1
      %s271 = scalar_select %p270, %s22, 1
      %p272 = scmp.lt.s32.totalorder %s269, 5
      %s273 = scalar_select %p272, %s269, 5
      %s274 = smul.addr %s271, 6
      %s275 = sadd.s32 %s273, %s274
      %s276 = smul.addr %s275, 4
      %s277 = scalar_lea.vmem %s1, %s276
      %p278 = pneg %p83
      %p279 = pneg %p80
      %p280 = pneg %p104
      %p281 = pneg %p101
      %p282 = pneg %p125
      %p283 = pneg %p122
      %p284 = pneg %p146
      %p285 = pneg %p143
      %p286 = pneg %p174
      %p287 = pneg %p171
      %p288 = scmp.lt.s32.totalorder %s22, 1
      %s289 = scalar_select %p288, %s22, 1
      %p290 = scmp.lt.s32.totalorder %s23, 4
      %s291 = scalar_select %p290, %s23, 4
      %s292 = smul.addr %s289, 5
      %s293 = sadd.s32 %s291, %s292
      %s294 = smul.addr %s293, 8
      %s295 = scalar_lea.vmem %s5, %s294
      %p296 = pneg %p200
      %p297 = pneg %p197
      %p298 = scmp.lt.s32.totalorder %s22, 1
      %s299 = scalar_select %p298, %s22, 1
      %s300 = smul.addr %s299, 8
      %s301 = scalar_lea.vmem %s6, %s300
      %p302 = scmp.lt.s32.totalorder %s22, 1
      %s303 = scalar_select %p302, %s22, 1
      %p304 = scmp.lt.s32.totalorder %s23, 5
      %s305 = scalar_select %p304, %s23, 5
      %s306 = smul.addr %s303, 6
      %s307 = sadd.s32 %s305, %s306
      %s308 = smul.addr %s307, 4
      %s309 = scalar_lea.vmem %s0, %s308
      %s310 = sadd.s32 %s23, 1
      %p311 = scmp.lt.s32.totalorder %s22, 1
      %s312 = scalar_select %p311, %s22, 1
      %p313 = scmp.lt.s32.totalorder %s310, 5
      %s314 = scalar_select %p313, %s310, 5
      %s315 = smul.addr %s312, 6
      %s316 = sadd.s32 %s314, %s315
      %s317 = smul.addr %s316, 4
      %s318 = scalar_lea.vmem %s1, %s317
      %s319 = sadd.s32 %s23, 1
      %p320 = scmp.lt.s32.totalorder %s22, 1
      %s321 = scalar_select %p320, %s22, 1
      %p322 = scmp.lt.s32.totalorder %s23, 4
      %s323 = scalar_select %p322, %s23, 4
      %s324 = smul.addr %s321, 5
      %s325 = sadd.s32 %s323, %s324
      %s326 = smul.addr %s325, 8
      %s327 = scalar_lea.vmem %s5, %s326
      %p328 = scmp.lt.s32.totalorder %s22, 1
      %s329 = scalar_select %p328, %s22, 1
      %s330 = smul.addr %s329, 8
      %s331 = scalar_lea.vmem %s6, %s330
      %p333 = scmp.eq.s32.totalorder %s23, 0
      // Predicated region
      $region41: #{generator_forward.7} parent=39 // pred_check
        %p334 = pneg %p333
      $region42: #{generator_forward.7} parent=39 // pred_check_branch
        %336 = sbr.rel (%p334) target = $region44
      $region43: #{generator_forward.7} parent=39 // pred_region
        %337 = vst [vmem:[%s331] sm:$0xff] 0.0
      $region44: #{generator_forward.7} parent=39 // pred_fallthru
        _
      %v338 = vld [vmem:[%s309] sm:$0x7]
      %v339 = vld [vmem:[%s318] sm:$0x7]
      %v340 = vld [vmem:[%s2] sm:$0xf]
      %v341 = vld [vmem:[%s2 + $0x4] sm:$0xf]
      %v342 = vld [vmem:[%s2 + $0x8] sm:$0xf]
      %v343 = vld [vmem:[%s2 + $0xc] sm:$0xf]
      %s344 = scalar_lea.vmem %s2, 16
      %v345 = vld [vmem:[%s344] sm:$0xf]
      %v346 = vld [vmem:[%s344 + $0x4] sm:$0xf]
      %v347 = vld [vmem:[%s344 + $0x8] sm:$0xf]
      %v348 = vld [vmem:[%s344 + $0xc] sm:$0xf]
      %v350 = vunpack.c.l.b16 %v338
      %v351 = vpack.c.b16 %v350, %v350
      %v353 = vshrl.u32 %v351, 16
      %v355 = vshll.u32 %v351, 16
      %v357 = vrot.slane %v355, 1
      %v358 = vor.u32 %v353, %v357
      %v363 = vunpack.c.l.b16 %v345
      %v364 = vunpack.c.l.b16 %v346
      %v365 = vunpack.c.l.b16 %v347
      %v366 = vunpack.c.l.b16 %v348
      %v367 = vpack.c.b16 %v364, %v363
      %v368 = vpack.c.b16 %v366, %v365
      %vm371 = vcmask 261120
      %v373 = vsel %vm371, %v358, 0
      %375 = vmatpush.bf16.msra.mxu0 0
      %376 = vmatpush.bf16.msra.mxu0 0
      %377 = vmatpush.bf16.msra.mxu0 0
      %378 = vmatpush.bf16.msra.mxu0 0
      %379 = vmatpush.bf16.msra.mxu0 0
      %380 = vmatpush.bf16.msra.mxu0 0
      %381 = vmatpush.bf16.msra.mxu0 %v368
      %382 = vmatpush.bf16.msra.mxu0 %v367
      %383 = vmatmul.bf16.gmra.mxu0 %v373
      %v384 = vpop.f32.mrf.mxu0
      %v385 = vadd.f32 0.0, %v384
      %v386 = vpop.f32.mrf.mxu0
      %387 = vdwg.mxu0
      %v392 = vunpack.c.l.b16 %v340
      %v393 = vunpack.c.l.b16 %v341
      %v394 = vunpack.c.l.b16 %v342
      %v395 = vunpack.c.l.b16 %v343
      %v396 = vpack.c.b16 %v393, %v392
      %v397 = vpack.c.b16 %v395, %v394
      %v401 = vsel %vm371, %v338, 0
      %403 = vmatpush.bf16.msra.mxu0 0
      %404 = vmatpush.bf16.msra.mxu0 0
      %405 = vmatpush.bf16.msra.mxu0 0
      %406 = vmatpush.bf16.msra.mxu0 0
      %407 = vmatpush.bf16.msra.mxu0 0
      %408 = vmatpush.bf16.msra.mxu0 0
      %409 = vmatpush.bf16.msra.mxu0 %v397
      %410 = vmatpush.bf16.msra.mxu0 %v396
      %411 = vmatmul.bf16.gmra.mxu0 %v401
      %v412 = vpop.f32.mrf.mxu0
      %v413 = vadd.f32 %v385, %v412
      %v414 = vpop.f32.mrf.mxu0
      %415 = vdwg.mxu0
      %s416 = scalar_lea.vmem %s2, 32
      %v417 = vld [vmem:[%s416] sm:$0xf]
      %v418 = vld [vmem:[%s416 + $0x4] sm:$0xf]
      %v419 = vld [vmem:[%s416 + $0x8] sm:$0xf]
      %v420 = vld [vmem:[%s416 + $0xc] sm:$0xf]
      %v425 = vunpack.c.l.b16 %v417
      %v426 = vunpack.c.l.b16 %v418
      %v427 = vunpack.c.l.b16 %v419
      %v428 = vunpack.c.l.b16 %v420
      %v429 = vpack.c.b16 %v426, %v425
      %v430 = vpack.c.b16 %v428, %v427
      %v434 = vsel %vm371, %v339, 0
      %436 = vmatpush.bf16.msra.mxu0 0
      %437 = vmatpush.bf16.msra.mxu0 0
      %438 = vmatpush.bf16.msra.mxu0 0
      %439 = vmatpush.bf16.msra.mxu0 0
      %440 = vmatpush.bf16.msra.mxu0 0
      %441 = vmatpush.bf16.msra.mxu0 0
      %442 = vmatpush.bf16.msra.mxu0 %v430
      %443 = vmatpush.bf16.msra.mxu0 %v429
      %444 = vmatmul.bf16.gmra.mxu0 %v434
      %v445 = vpop.f32.mrf.mxu0
      %v446 = vadd.f32 0.0, %v445
      %v447 = vpop.f32.mrf.mxu0
      %448 = vdwg.mxu0
      %v449 = vadd.f32 %v413, %v446
      %s450 = scalar_lea.vmem %s2, 48
      %v451 = vld [vmem:[%s450] sm:$0xf]
      %v452 = vld [vmem:[%s450 + $0x4] sm:$0xf]
      %v453 = vld [vmem:[%s450 + $0x8] sm:$0xf]
      %v454 = vld [vmem:[%s450 + $0xc] sm:$0xf]
      %v456 = vunpack.c.l.b16 %v339
      %v457 = vpack.c.b16 %v456, %v456
      %v459 = vshrl.u32 %v457, 16
      %v461 = vshll.u32 %v457, 16
      %v463 = vrot.slane %v461, 1
      %v464 = vor.u32 %v459, %v463
      %v469 = vunpack.c.l.b16 %v451
      %v470 = vunpack.c.l.b16 %v452
      %v471 = vunpack.c.l.b16 %v453
      %v472 = vunpack.c.l.b16 %v454
      %v473 = vpack.c.b16 %v470, %v469
      %v474 = vpack.c.b16 %v472, %v471
      %v478 = vsel %vm371, %v464, 0
      %480 = vmatpush.bf16.msra.mxu0 0
      %481 = vmatpush.bf16.msra.mxu0 0
      %482 = vmatpush.bf16.msra.mxu0 0
      %483 = vmatpush.bf16.msra.mxu0 0
      %484 = vmatpush.bf16.msra.mxu0 0
      %485 = vmatpush.bf16.msra.mxu0 0
      %486 = vmatpush.bf16.msra.mxu0 %v474
      %487 = vmatpush.bf16.msra.mxu0 %v473
      %488 = vmatmul.bf16.gmra.mxu0 %v478
      %v489 = vpop.f32.mrf.mxu0
      %v490 = vadd.f32 0.0, %v489
      %v491 = vpop.f32.mrf.mxu0
      %492 = vdwg.mxu0
      %v493 = vadd.f32 %v449, %v490
      %v494 = vld [vmem:[%s3] sm:$0x1]
      %v496 = vperm.slane %v494, 0
      %v498 = vadd.f32 %v493, %v496
      %499 = vst [vmem:[%s327] sm:$0x1f] %v498
      %v500 = vld [vmem:[%s4] sm:$0x1]
      %v501 = vld [vmem:[%s4 + $0x1] sm:$0x1]
      %v502 = vstv %s23
      %v503 = vsub.s32 %v502, %v500
      %v504 = vlaneseq
      %v505 = vshrl.u32 %v504, 7
      %v506 = vperm.slane %v501, 0
      %v507 = vsub.s32 %v505, %v506
      %vm508 = vcmp.ge.s32.totalorder %v503, 0
      %vm509 = vcmp.lt.s32.totalorder %v503, 4
      %vm510 = vmand %vm508, %vm509
      %vm511 = vcmp.ge.s32.totalorder %v507, 0
      %v512 = vsel %vm510, 1, 0
      %v513 = vperm.slane %v512, 0
      %vm514 = vcmp.eq.s32.totalorder %v513, 1
      %vm515 = vmand %vm514, %vm511
      %vm516 = vcmp.lt.s32.totalorder %v507, 4
      %vm517 = vmand %vm515, %vm516
      %v518 = vsel %vm517, 1, 0
      %v519 = vcvt.s32.f32 %v518
      %v520 = vmul.f32 %v498, %v519
      %v521 = vld [vmem:[%s331] sm:$0x1]
      %vm522 = vcmask 1044480
      %v523 = vsel %vm522, %v520, 0.0
      %v524 = vrot.slane %v523, 4
      %v525 = vadd.f32 %v523, %v524
      %v526 = vrot.slane %v525, 2
      %v527 = vadd.f32 %v525, %v526
      %v528 = vrot.slane %v527, 1
      %v529 = vadd.f32 %v527, %v528
      %v530 = vadd.f32 %v521, %v529
      %531 = vst [vmem:[%s331] sm:$0x1] %v530
      %v532 = vld [vmem:[%s331 + $0x1] sm:$0x1]
      %v533 = vmul.f32 %v520, %v498
      %v534 = vsel %vm522, %v533, 0.0
      %v535 = vrot.slane %v534, 4
      %v536 = vadd.f32 %v534, %v535
      %v537 = vrot.slane %v536, 2
      %v538 = vadd.f32 %v536, %v537
      %v539 = vrot.slane %v538, 1
      %v540 = vadd.f32 %v538, %v539
      %v541 = vadd.f32 %v532, %v540
      %542 = vst [vmem:[%s331 + $0x1] sm:$0x1] %v541
      %p543 = scmp.lt.s32.totalorder %s22, 1
      %s544 = scalar_select %p543, %s22, 1
      %p545 = scmp.lt.s32.totalorder %s23, 4
      %s546 = scalar_select %p545, %s23, 4
      %s547 = smul.addr %s544, 5
      %s548 = sadd.s32 %s546, %s547
      %s549 = smul.addr %s548, 8
      %s550 = scalar_lea.vmem %s5, %s549
      %p551 = scmp.lt.s32.totalorder %s22, 1
      %s552 = scalar_select %p551, %s22, 1
      %s553 = smul.addr %s552, 8
      %s554 = scalar_lea.vmem %s6, %s553
      // Predicated region
      $region45: #{generator_forward.7} parent=39 // pred_check
        %p555 = pneg %p171
      $region46: #{generator_forward.7} parent=39 // pred_check_branch
        %557 = sbr.rel (%p555) target = $region48
      $region47: #{generator_forward.7} parent=39 // pred_region
        _
      $region48: #{generator_forward.7} parent=39 // pred_fallthru
        _
      // Predicated region
      $region49: #{generator_forward.7} parent=39 // pred_check
        %p558 = pneg %p197
      $region50: #{generator_forward.7} parent=39 // pred_check_branch
        %560 = sbr.rel (%p558) target = $region52
      $region51: #{generator_forward.7} parent=39 // pred_region
        _
      $region52: #{generator_forward.7} parent=39 // pred_fallthru
        _
    $region40: #{generator_forward.7} parent=5 // pred_fallthru
      _
    %p561 = scmp.le.s32.totalorder 2, %s13
    // Predicated region
    $region53: #{generator_forward.7} parent=5 // pred_check
      %p562 = pneg %p561
    $region54: #{generator_forward.7} parent=5 // pred_check_branch
      %564 = sbr.rel (%p562) target = $region56
    $region55: #{generator_forward.7} parent=5 // pred_region
      %s565 = ssub.s32 %s13, 2
      // Predicated region
      $region57: #{generator_forward.7} parent=55 // pred_check
        %p566 = pneg %p177
      $region58: #{generator_forward.7} parent=55 // pred_check_branch
        %568 = sbr.rel (%p566) target = $region60
      $region59: #{generator_forward.7} parent=55 // pred_region
        %p569 = scmp.lt.s32.totalorder %s24, 1
        %s570 = scalar_select %p569, %s24, 1
        %p571 = scmp.lt.s32.totalorder %s25, 4
        %s572 = scalar_select %p571, %s25, 4
        %s573 = smul.addr %s570, 5
        %s574 = sadd.s32 %s572, %s573
        %s575 = smul.addr %s574, 8
        %s576 = scalar_lea.vmem %s5, %s575
      $region60: #{generator_forward.7} parent=55 // pred_fallthru
        _
      // Predicated region
      $region61: #{generator_forward.7} parent=55 // pred_check
        %p577 = pneg %p203
      $region62: #{generator_forward.7} parent=55 // pred_check_branch
        %579 = sbr.rel (%p577) target = $region64
      $region63: #{generator_forward.7} parent=55 // pred_region
        %p580 = scmp.lt.s32.totalorder %s24, 1
        %s581 = scalar_select %p580, %s24, 1
        %s582 = smul.addr %s581, 8
        %s583 = scalar_lea.vmem %s6, %s582
      $region64: #{generator_forward.7} parent=55 // pred_fallthru
        _
    $region56: #{generator_forward.7} parent=5 // pred_fallthru
      _
  $region6: #{generator_forward.7} parent=0 // loop_footer
    %s17 = sadd.s32 1, %s13
  $region7: #{generator_forward.7} parent=0 // loop_footer_branch
    %12 = sbr.rel target = $region3
  $region8: #{generator_forward.7} parent=0 // loop_exit
    _

// kernel: generator_forward.8
$region0: #{generator_forward.8}
  #allocation0 [shape = 'u32[]', space=smem, size = 0x4, offset = 0x4, fixed_abs, tag = 'smem constant byte address 0x4 - core index']
  #allocation1 [shape = 'u32[72,128]{1,0:T(1,128)}', space=vmem, size = 0x9000, scoped, tag = 'internal scratch']
  %s0 = inlined_call_operand.vmem [shape: f32[10,5,128], index: 0, kind: input, shape index: {}]
  %s1 = inlined_call_operand.vmem [shape: f32[1,1,128], index: 1, kind: input, shape index: {}]
  %s2 = inlined_call_operand.vmem [shape: f32[1,1,128], index: 2, kind: input, shape index: {}]
  %s3 = inlined_call_operand.vmem [shape: bf16[10,5,128], index: 3, kind: output, shape index: {}]
  %s4 = sld [smem:[#allocation0]]
  $region22: #{generator_forward.8} parent=0
    _
  %s6 = ssub.s32 1, %s4
  %s7 = scalar_select 0, %s6, %s4
  // Predicated region
  $region2: #{generator_forward.8} parent=0 // pred_check
    _
  $region3: #{generator_forward.8} parent=0 // pred_check_branch
    %9 = sbr.rel (0) target = $region5
  $region4: #{generator_forward.8} parent=0 // pred_region
    _
  $region5: #{generator_forward.8} parent=0 // pred_fallthru
    _
  // Predicated region
  $region6: #{generator_forward.8} parent=0 // pred_check
    _
  $region7: #{generator_forward.8} parent=0 // pred_check_branch
    %11 = sbr.rel (0) target = $region9
  $region8: #{generator_forward.8} parent=0 // pred_region
    _
  $region9: #{generator_forward.8} parent=0 // pred_fallthru
    _
  // Predicated region
  $region10: #{generator_forward.8} parent=0 // pred_check
    _
  $region11: #{generator_forward.8} parent=0 // pred_check_branch
    %13 = sbr.rel (0) target = $region13
  $region12: #{generator_forward.8} parent=0 // pred_region
    _
  $region13: #{generator_forward.8} parent=0 // pred_fallthru
    _
  %v14 = vld [vmem:[%s0] sm:$0x1f]
  %v15 = vld [vmem:[%s0 + $0x8] sm:$0x1f]
  %v16 = vld [vmem:[%s0 + $0x10] sm:$0x1f]
  %v17 = vld [vmem:[%s0 + $0x18] sm:$0x1f]
  %v18 = vld [vmem:[%s0 + $0x20] sm:$0x1f]
  %v19 = vld [vmem:[%s0 + $0x28] sm:$0x1f]
  %v20 = vld [vmem:[%s0 + $0x30] sm:$0x1f]
  %v21 = vld [vmem:[%s0 + $0x38] sm:$0x1f]
  %v22 = vld [vmem:[%s0 + $0x40] sm:$0x1f]
  %v23 = vld [vmem:[%s0 + $0x48] sm:$0x1f]
  %v24 = vld [vmem:[%s1] sm:$0x1]
  %v26 = vperm.slane %v24, 0
  %v28 = vmul.f32 %v14, %v26
  %v29 = vmul.f32 %v15, %v26
  %v30 = vmul.f32 %v16, %v26
  %v31 = vmul.f32 %v17, %v26
  %v32 = vmul.f32 %v18, %v26
  %v33 = vmul.f32 %v19, %v26
  %v34 = vmul.f32 %v20, %v26
  %v35 = vmul.f32 %v21, %v26
  %v36 = vmul.f32 %v22, %v26
  %v37 = vmul.f32 %v23, %v26
  %v38 = vld [vmem:[%s2] sm:$0x1]
  %v40 = vperm.slane %v38, 0
  %v42 = vadd.f32 %v28, %v40
  %v43 = vadd.f32 %v29, %v40
  %v44 = vadd.f32 %v30, %v40
  %v45 = vadd.f32 %v31, %v40
  %v46 = vadd.f32 %v32, %v40
  %v47 = vadd.f32 %v33, %v40
  %v48 = vadd.f32 %v34, %v40
  %v49 = vadd.f32 %v35, %v40
  %v50 = vadd.f32 %v36, %v40
  %v51 = vadd.f32 %v37, %v40
  %v52 = vmax.f32 %v42, 0.0
  %v53 = vmax.f32 %v43, 0.0
  %v54 = vmax.f32 %v44, 0.0
  %v55 = vmax.f32 %v45, 0.0
  %v56 = vmax.f32 %v46, 0.0
  %v57 = vmax.f32 %v47, 0.0
  %v58 = vmax.f32 %v48, 0.0
  %v59 = vmax.f32 %v49, 0.0
  %v60 = vmax.f32 %v50, 0.0
  %v61 = vmax.f32 %v51, 0.0
  %v62 = vpack.c.bf16 %v52, %v52
  %v63 = vpack.c.bf16 %v53, %v53
  %v64 = vpack.c.bf16 %v54, %v54
  %v65 = vpack.c.bf16 %v55, %v55
  %v66 = vpack.c.bf16 %v56, %v56
  %v67 = vpack.c.bf16 %v57, %v57
  %v68 = vpack.c.bf16 %v58, %v58
  %v69 = vpack.c.bf16 %v59, %v59
  %v70 = vpack.c.bf16 %v60, %v60
  %v71 = vpack.c.bf16 %v61, %v61
  %vm72 = vcmask 1042432
  %vm73 = vsmask.f32 2304
  %vm74 = vmand %vm72, %vm73
  %v75 = vld [vmem:[%s3] sm:$0x7]
  %v76 = vsel %vm74, %v62, %v75
  %77 = vst [vmem:[%s3] sm:$0x7] %v76
  %v78 = vld [vmem:[%s3 + $0x4] sm:$0x7]
  %v79 = vsel %vm74, %v63, %v78
  %80 = vst [vmem:[%s3 + $0x4] sm:$0x7] %v79
  %v81 = vld [vmem:[%s3 + $0x8] sm:$0x7]
  %v82 = vsel %vm74, %v64, %v81
  %83 = vst [vmem:[%s3 + $0x8] sm:$0x7] %v82
  %v84 = vld [vmem:[%s3 + $0xc] sm:$0x7]
  %v85 = vsel %vm74, %v65, %v84
  %86 = vst [vmem:[%s3 + $0xc] sm:$0x7] %v85
  %v87 = vld [vmem:[%s3 + $0x10] sm:$0x7]
  %v88 = vsel %vm74, %v66, %v87
  %89 = vst [vmem:[%s3 + $0x10] sm:$0x7] %v88
  %v90 = vld [vmem:[%s3 + $0x14] sm:$0x7]
  %v91 = vsel %vm74, %v67, %v90
  %92 = vst [vmem:[%s3 + $0x14] sm:$0x7] %v91
  %v93 = vld [vmem:[%s3 + $0x18] sm:$0x7]
  %v94 = vsel %vm74, %v68, %v93
  %95 = vst [vmem:[%s3 + $0x18] sm:$0x7] %v94
  %v96 = vld [vmem:[%s3 + $0x1c] sm:$0x7]
  %v97 = vsel %vm74, %v69, %v96
  %98 = vst [vmem:[%s3 + $0x1c] sm:$0x7] %v97
  %v99 = vld [vmem:[%s3 + $0x20] sm:$0x7]
  %v100 = vsel %vm74, %v70, %v99
  %101 = vst [vmem:[%s3 + $0x20] sm:$0x7] %v100
  %v102 = vld [vmem:[%s3 + $0x24] sm:$0x7]
  %v103 = vsel %vm74, %v71, %v102
  %104 = vst [vmem:[%s3 + $0x24] sm:$0x7] %v103
  // Predicated region
  $region14: #{generator_forward.8} parent=0 // pred_check
    _
  $region15: #{generator_forward.8} parent=0 // pred_check_branch
    %106 = sbr.rel (0) target = $region17
  $region16: #{generator_forward.8} parent=0 // pred_region
    _
  $region17: #{generator_forward.8} parent=0 // pred_fallthru
    _
  // Predicated region
  $region18: #{generator_forward.8} parent=0 // pred_check
    _
  $region19: #{generator_forward.8} parent=0 // pred_check_branch
    %108 = sbr.rel (0) target = $region21
  $region20: #{generator_forward.8} parent=0 // pred_region
    _
  $region21: #{generator_forward.8} parent=0 // pred_fallthru
    _

// kernel: generator_forward.9
$region0: #{generator_forward.9}
  #allocation0 [shape = 'u32[]', space=smem, size = 0x4, offset = 0x4, fixed_abs, tag = 'smem constant byte address 0x4 - core index']
  #allocation1 [shape = 'u32[72,128]{1,0:T(1,128)}', space=vmem, size = 0x9000, scoped, tag = 'internal scratch']
  %s0 = inlined_call_operand.vmem [shape: bf16[2,10,10,16], index: 0, kind: input, shape index: {}, may-alias: {0,1}]
  %s1 = inlined_call_operand.vmem [shape: bf16[2,10,10,16], index: 1, kind: input, shape index: {}, may-alias: {0,1}]
  %s2 = inlined_call_operand.vmem [shape: bf16[4,16,128], index: 2, kind: input, shape index: {}]
  %s3 = inlined_call_operand.vmem [shape: f32[1,128], index: 3, kind: input, shape index: {}]
  %s4 = inlined_call_operand.vmem [shape: f32[2,9,9,128], index: 4, kind: output, shape index: {}]
  %s5 = sld [smem:[#allocation0]]
  $region49: #{generator_forward.9} parent=0
    _
  %s7 = ssub.s32 1, %s5
  %s8 = scalar_select 0, %s7, %s5
  loop: start=0, step=1, limit=20
  $region2: #{generator_forward.9} parent=0 // loop_pre_header
    _
  $region3: #{generator_forward.9} parent=0 // loop_header
    %s10 = sphi 0, %s14
    %p11 = scmp.ge.s32.totalorder %s10, 20
    %s17 = sphi 0, %s29
    %s18 = sphi 0, %s25
    %s19 = sphi 0, %s17
    %s20 = sphi 0, %s18
    %s21 = sphi 0, %s19
    %s22 = sphi 0, %s20
    %s34 = sphi 0, %s36
    %s37 = sphi 0, %s34
    %s38 = sphi 0, %s37
    %s54 = sphi 0, %s38
    %s64 = sphi 0, %s66
    %s67 = sphi 0, %s64
    %s68 = sphi 0, %s67
    %s84 = sphi 0, %s68
    %s88 = sphi 0, %s88
    %s90 = sphi 0, %s88
    %s91 = sphi 0, %s90
    %s105 = sphi 0, %s91
    %s109 = sphi 0, %s109
    %s111 = sphi 0, %s109
    %s112 = sphi 0, %s111
    %s126 = sphi 0, %s112
    %s134 = sphi 0, %s136
    %s137 = sphi 0, %s134
    %s138 = sphi 0, %s137
    %s154 = sphi 0, %s138
  $region4: #{generator_forward.9} parent=0 // loop_header_branch
    %13 = sbr.rel (%p11) target = $region8
  $region5: #{generator_forward.9} parent=0 // loop_body
    %s15 = ssub.s32 %s10, 1
    %s16 = ssub.s32 %s10, 2
    %s23 = sadd.s32 1, %s18
    %p24 = scmp.ge.s32.totalorder %s23, 9
    %s25 = scalar_select %p24, 0, %s23
    %s26 = sadd.s32 1, %s17
    %s27 = scalar_select %p24, %s26, %s17
    %p28 = scmp.ge.s32.totalorder %s27, 2
    %s29 = scalar_select %p28, 0, %s27
    %s30 = ssub.s32 %s17, %s29
    %s31 = ssub.s32 %s18, %s25
    %s32 = sor.u32 %s30, %s31
    %p33 = scmp.eq.s32.totalorder %s32, 0
    %s35 = sadd.s32 %s34, 1
    %s36 = scalar_select %p33, %s34, %s35
    %p39 = pneg %p33
    %p40 = scmp.eq.s32.totalorder %s10, 17
    %p41 = por %p39, %p40
    %p42 = scmp.ne.s32.totalorder %s34, %s37
    %p43 = scmp.eq.s32.totalorder %s10, 0
    %p44 = por %p42, %p43
    %p45 = scmp.ne.s32.totalorder %s34, %s37
    %p46 = scmp.eq.s32.totalorder %s15, 17
    %p47 = por %p45, %p46
    %p48 = scmp.ne.s32.totalorder %s37, %s38
    %p49 = scmp.eq.s32.totalorder %s15, 0
    %p50 = por %p48, %p49
    %p51 = scmp.ne.s32.totalorder %s37, %s38
    %p52 = scmp.eq.s32.totalorder %s16, 17
    %p53 = por %p51, %p52
    %p55 = scmp.ne.s32.totalorder %s38, %s54
    %p56 = scmp.eq.s32.totalorder %s16, 0
    %p57 = por %p55, %p56
    %s58 = sadd.s32 %s18, 1
    %s59 = sadd.s32 %s25, 1
    %s60 = ssub.s32 %s17, %s29
    %s61 = ssub.s32 %s58, %s59
    %s62 = sor.u32 %s60, %s61
    %p63 = scmp.eq.s32.totalorder %s62, 0
    %s65 = sadd.s32 %s64, 1
    %s66 = scalar_select %p63, %s64, %s65
    %p69 = pneg %p63
    %p70 = scmp.eq.s32.totalorder %s10, 17
    %p71 = por %p69, %p70
    %p72 = scmp.ne.s32.totalorder %s64, %s67
    %p73 = scmp.eq.s32.totalorder %s10, 0
    %p74 = por %p72, %p73
    %p75 = scmp.ne.s32.totalorder %s64, %s67
    %p76 = scmp.eq.s32.totalorder %s15, 17
    %p77 = por %p75, %p76
    %p78 = scmp.ne.s32.totalorder %s67, %s68
    %p79 = scmp.eq.s32.totalorder %s15, 0
    %p80 = por %p78, %p79
    %p81 = scmp.ne.s32.totalorder %s67, %s68
    %p82 = scmp.eq.s32.totalorder %s16, 17
    %p83 = por %p81, %p82
    %p85 = scmp.ne.s32.totalorder %s68, %s84
    %p86 = scmp.eq.s32.totalorder %s16, 0
    %p87 = por %p85, %p86
    %s89 = sadd.s32 %s88, 1
    %p92 = scmp.eq.s32.totalorder %s10, 17
    %p93 = scmp.ne.s32.totalorder %s88, %s90
    %p94 = scmp.eq.s32.totalorder %s10, 0
    %p95 = por %p93, %p94
    %p96 = scmp.ne.s32.totalorder %s88, %s90
    %p97 = scmp.eq.s32.totalorder %s15, 17
    %p98 = por %p96, %p97
    %p99 = scmp.ne.s32.totalorder %s90, %s91
    %p100 = scmp.eq.s32.totalorder %s15, 0
    %p101 = por %p99, %p100
    %p102 = scmp.ne.s32.totalorder %s90, %s91
    %p103 = scmp.eq.s32.totalorder %s16, 17
    %p104 = por %p102, %p103
    %p106 = scmp.ne.s32.totalorder %s91, %s105
    %p107 = scmp.eq.s32.totalorder %s16, 0
    %p108 = por %p106, %p107
    %s110 = sadd.s32 %s109, 1
    %p113 = scmp.eq.s32.totalorder %s10, 17
    %p114 = scmp.ne.s32.totalorder %s109, %s111
    %p115 = scmp.eq.s32.totalorder %s10, 0
    %p116 = por %p114, %p115
    %p117 = scmp.ne.s32.totalorder %s109, %s111
    %p118 = scmp.eq.s32.totalorder %s15, 17
    %p119 = por %p117, %p118
    %p120 = scmp.ne.s32.totalorder %s111, %s112
    %p121 = scmp.eq.s32.totalorder %s15, 0
    %p122 = por %p120, %p121
    %p123 = scmp.ne.s32.totalorder %s111, %s112
    %p124 = scmp.eq.s32.totalorder %s16, 17
    %p125 = por %p123, %p124
    %p127 = scmp.ne.s32.totalorder %s112, %s126
    %p128 = scmp.eq.s32.totalorder %s16, 0
    %p129 = por %p127, %p128
    %s130 = ssub.s32 %s17, %s29
    %s131 = ssub.s32 %s18, %s25
    %s132 = sor.u32 %s130, %s131
    %p133 = scmp.eq.s32.totalorder %s132, 0
    %s135 = sadd.s32 %s134, 1
    %s136 = scalar_select %p133, %s134, %s135
    %p139 = pneg %p133
    %p140 = scmp.eq.s32.totalorder %s10, 17
    %p141 = por %p139, %p140
    %p142 = scmp.ne.s32.totalorder %s134, %s137
    %p143 = scmp.eq.s32.totalorder %s10, 0
    %p144 = por %p142, %p143
    %p145 = scmp.ne.s32.totalorder %s134, %s137
    %p146 = scmp.eq.s32.totalorder %s15, 17
    %p147 = por %p145, %p146
    %p148 = scmp.ne.s32.totalorder %s137, %s138
    %p149 = scmp.eq.s32.totalorder %s15, 0
    %p150 = por %p148, %p149
    %p151 = scmp.ne.s32.totalorder %s137, %s138
    %p152 = scmp.eq.s32.totalorder %s16, 17
    %p153 = por %p151, %p152
    %p155 = scmp.ne.s32.totalorder %s138, %s154
    %p156 = scmp.eq.s32.totalorder %s16, 0
    %p157 = por %p155, %p156
    %p158 = scmp.le.s32.totalorder 1, %s10
    %p159 = scmp.lt.s32.totalorder %s10, 19
    %p160 = pnand %p158, %p159
    %p161 = pneg %p160
    // Predicated region
    $region9: #{generator_forward.9} parent=5 // pred_check
      _
    $region10: #{generator_forward.9} parent=5 // pred_check_branch
      %163 = sbr.rel (%p160) target = $region12
    $region11: #{generator_forward.9} parent=5 // pred_region
      %s164 = ssub.s32 %s10, 1
      // Predicated region
      $region13: #{generator_forward.9} parent=11 // pred_check
        %p165 = pneg %p101
      $region14: #{generator_forward.9} parent=11 // pred_check_branch
        %167 = sbr.rel (%p165) target = $region16
      $region15: #{generator_forward.9} parent=11 // pred_region
        _
      $region16: #{generator_forward.9} parent=11 // pred_fallthru
        _
      // Predicated region
      $region17: #{generator_forward.9} parent=11 // pred_check
        %p168 = pneg %p122
      $region18: #{generator_forward.9} parent=11 // pred_check_branch
        %170 = sbr.rel (%p168) target = $region20
      $region19: #{generator_forward.9} parent=11 // pred_region
        _
      $region20: #{generator_forward.9} parent=11 // pred_fallthru
        _
    $region12: #{generator_forward.9} parent=5 // pred_fallthru
      _
    %p171 = scmp.lt.s32.totalorder %s10, 18
    // Predicated region
    $region21: #{generator_forward.9} parent=5 // pred_check
      %p172 = pneg %p171
    $region22: #{generator_forward.9} parent=5 // pred_check_branch
      %174 = sbr.rel (%p172) target = $region24
    $region23: #{generator_forward.9} parent=5 // pred_region
      // Predicated region
      $region25: #{generator_forward.9} parent=23 // pred_check
        %p175 = pneg %p44
      $region26: #{generator_forward.9} parent=23 // pred_check_branch
        %177 = sbr.rel (%p175) target = $region28
      $region27: #{generator_forward.9} parent=23 // pred_region
        %p178 = scmp.lt.s32.totalorder %s17, 1
        %s179 = scalar_select %p178, %s17, 1
        %p180 = scmp.lt.s32.totalorder %s18, 9
        %s181 = scalar_select %p180, %s18, 9
        %s182 = smul.addr %s181, 2
        %s183 = smul.addr %s179, 20
        %s184 = sadd.s32 %s182, %s183
        %s185 = smul.addr %s184, 4
        %s186 = scalar_lea.vmem %s0, %s185
      $region28: #{generator_forward.9} parent=23 // pred_fallthru
        _
      // Predicated region
      $region29: #{generator_forward.9} parent=23 // pred_check
        %p187 = pneg %p74
      $region30: #{generator_forward.9} parent=23 // pred_check_branch
        %189 = sbr.rel (%p187) target = $region32
      $region31: #{generator_forward.9} parent=23 // pred_region
        %s190 = sadd.s32 %s18, 1
        %p191 = scmp.lt.s32.totalorder %s17, 1
        %s192 = scalar_select %p191, %s17, 1
        %p193 = scmp.lt.s32.totalorder %s190, 9
        %s194 = scalar_select %p193, %s190, 9
        %s195 = smul.addr %s194, 2
        %s196 = smul.addr %s192, 20
        %s197 = sadd.s32 %s195, %s196
        %s198 = smul.addr %s197, 4
        %s199 = scalar_lea.vmem %s1, %s198
        %s200 = sadd.s32 %s18, 1
      $region32: #{generator_forward.9} parent=23 // pred_fallthru
        _
    $region24: #{generator_forward.9} parent=5 // pred_fallthru
      _
    %p201 = scmp.le.s32.totalorder 1, %s10
    %p202 = scmp.lt.s32.totalorder %s10, 19
    %p203 = pnand %p201, %p202
    %p204 = pneg %p203
    // Predicated region
    $region33: #{generator_forward.9} parent=5 // pred_check
      _
    $region34: #{generator_forward.9} parent=5 // pred_check_branch
      %206 = sbr.rel (%p203) target = $region36
    $region35: #{generator_forward.9} parent=5 // pred_region
      %s207 = ssub.s32 %s10, 1
      %p208 = scmp.lt.s32.totalorder %s19, 1
      %s209 = scalar_select %p208, %s19, 1
      %p210 = scmp.lt.s32.totalorder %s20, 9
      %s211 = scalar_select %p210, %s20, 9
      %s212 = smul.addr %s211, 2
      %s213 = smul.addr %s209, 20
      %s214 = sadd.s32 %s212, %s213
      %s215 = smul.addr %s214, 4
      %s216 = scalar_lea.vmem %s0, %s215
      %p217 = pneg %p50
      %p218 = pneg %p47
      %s219 = sadd.s32 %s20, 1
      %p220 = scmp.lt.s32.totalorder %s19, 1
      %s221 = scalar_select %p220, %s19, 1
      %p222 = scmp.lt.s32.totalorder %s219, 9
      %s223 = scalar_select %p222, %s219, 9
      %s224 = smul.addr %s223, 2
      %s225 = smul.addr %s221, 20
      %s226 = sadd.s32 %s224, %s225
      %s227 = smul.addr %s226, 4
      %s228 = scalar_lea.vmem %s1, %s227
      %p229 = pneg %p80
      %p230 = pneg %p77
      %p231 = pneg %p101
      %p232 = pneg %p98
      %p233 = pneg %p122
      %p234 = pneg %p119
      %p235 = pneg %p150
      %p236 = pneg %p147
      %p237 = scmp.lt.s32.totalorder %s19, 1
      %s238 = scalar_select %p237, %s19, 1
      %p239 = scmp.lt.s32.totalorder %s20, 8
      %s240 = scalar_select %p239, %s20, 8
      %s241 = smul.addr %s240, 2
      %s242 = smul.addr %s238, 18
      %s243 = sadd.s32 %s241, %s242
      %s244 = smul.addr %s243, 8
      %s245 = scalar_lea.vmem %s4, %s244
      %p246 = scmp.lt.s32.totalorder %s19, 1
      %s247 = scalar_select %p246, %s19, 1
      %p248 = scmp.lt.s32.totalorder %s20, 9
      %s249 = scalar_select %p248, %s20, 9
      %s250 = smul.addr %s249, 2
      %s251 = smul.addr %s247, 20
      %s252 = sadd.s32 %s250, %s251
      %s253 = smul.addr %s252, 4
      %s254 = scalar_lea.vmem %s0, %s253
      %s255 = sadd.s32 %s20, 1
      %p256 = scmp.lt.s32.totalorder %s19, 1
      %s257 = scalar_select %p256, %s19, 1
      %p258 = scmp.lt.s32.totalorder %s255, 9
      %s259 = scalar_select %p258, %s255, 9
      %s260 = smul.addr %s259, 2
      %s261 = smul.addr %s257, 20
      %s262 = sadd.s32 %s260, %s261
      %s263 = smul.addr %s262, 4
      %s264 = scalar_lea.vmem %s1, %s263
      %s265 = sadd.s32 %s20, 1
      %p266 = scmp.lt.s32.totalorder %s19, 1
      %s267 = scalar_select %p266, %s19, 1
      %p268 = scmp.lt.s32.totalorder %s20, 8
      %s269 = scalar_select %p268, %s20, 8
      %s270 = smul.addr %s269, 2
      %s271 = smul.addr %s267, 18
      %s272 = sadd.s32 %s270, %s271
      %s273 = smul.addr %s272, 8
      %s274 = scalar_lea.vmem %s4, %s273
      %v276 = vld [vmem:[%s254] sm:$0xf]
      %v277 = vld [vmem:[%s254 + $0x4] sm:$0x1]
      %v278 = vld [vmem:[%s264] sm:$0xf]
      %v279 = vld [vmem:[%s264 + $0x4] sm:$0x1]
      %v280 = vld [vmem:[%s2] sm:$0xf]
      %v281 = vld [vmem:[%s2 + $0x4] sm:$0xf]
      %s282 = scalar_lea.vmem %s2, 8
      %v283 = vld [vmem:[%s282] sm:$0xf]
      %v284 = vld [vmem:[%s282 + $0x4] sm:$0xf]
      %v287 = vunpack.c.l.b16 %v276
      %v288 = vunpack.c.l.b16 %v277
      %v289 = vpack.c.b16 %v288, %v287
      %v291 = vshrl.u32 %v289, 16
      %v293 = vshll.u32 %v289, 16
      %v295 = vrot.slane %v293, 1
      %v296 = vor.u32 %v291, %v295
      %v299 = vunpack.c.l.b16 %v283
      %v300 = vunpack.c.l.b16 %v284
      %v301 = vpack.c.b16 %v300, %v299
      %vm303 = vcmask 130048
      %v305 = vsel %vm303, %v296, 0
      %307 = vmatpush.bf16.msra.mxu0 0
      %308 = vmatpush.bf16.msra.mxu0 0
      %309 = vmatpush.bf16.msra.mxu0 0
      %310 = vmatpush.bf16.msra.mxu0 0
      %311 = vmatpush.bf16.msra.mxu0 0
      %312 = vmatpush.bf16.msra.mxu0 0
      %313 = vmatpush.bf16.msra.mxu0 0
      %314 = vmatpush.bf16.msra.mxu0 %v301
      %315 = vmatmul.bf16.gmra.mxu0 %v305
      %v316 = vpop.f32.mrf.mxu0
      %v317 = vadd.f32 0.0, %v316
      %v318 = vpop.f32.mrf.mxu0
      %v319 = vadd.f32 0.0, %v318
      %320 = vdwg.mxu0
      %v323 = vunpack.c.l.b16 %v280
      %v324 = vunpack.c.l.b16 %v281
      %v325 = vpack.c.b16 %v324, %v323
      %v327 = vsel %vm303, %v289, 0
      %329 = vmatpush.bf16.msra.mxu0 0
      %330 = vmatpush.bf16.msra.mxu0 0
      %331 = vmatpush.bf16.msra.mxu0 0
      %332 = vmatpush.bf16.msra.mxu0 0
      %333 = vmatpush.bf16.msra.mxu0 0
      %334 = vmatpush.bf16.msra.mxu0 0
      %335 = vmatpush.bf16.msra.mxu0 0
      %336 = vmatpush.bf16.msra.mxu0 %v325
      %337 = vmatmul.bf16.gmra.mxu0 %v327
      %v338 = vpop.f32.mrf.mxu0
      %v339 = vadd.f32 %v317, %v338
      %v340 = vpop.f32.mrf.mxu0
      %v341 = vadd.f32 %v319, %v340
      %342 = vdwg.mxu0
      %s343 = scalar_lea.vmem %s2, 16
      %v344 = vld [vmem:[%s343] sm:$0xf]
      %v345 = vld [vmem:[%s343 + $0x4] sm:$0xf]
      %v348 = vunpack.c.l.b16 %v278
      %v349 = vunpack.c.l.b16 %v279
      %v350 = vpack.c.b16 %v349, %v348
      %v353 = vunpack.c.l.b16 %v344
      %v354 = vunpack.c.l.b16 %v345
      %v355 = vpack.c.b16 %v354, %v353
      %v358 = vsel %vm303, %v350, 0
      %360 = vmatpush.bf16.msra.mxu0 0
      %361 = vmatpush.bf16.msra.mxu0 0
      %362 = vmatpush.bf16.msra.mxu0 0
      %363 = vmatpush.bf16.msra.mxu0 0
      %364 = vmatpush.bf16.msra.mxu0 0
      %365 = vmatpush.bf16.msra.mxu0 0
      %366 = vmatpush.bf16.msra.mxu0 0
      %367 = vmatpush.bf16.msra.mxu0 %v355
      %368 = vmatmul.bf16.gmra.mxu0 %v358
      %v369 = vpop.f32.mrf.mxu0
      %v370 = vadd.f32 0.0, %v369
      %v371 = vpop.f32.mrf.mxu0
      %v372 = vadd.f32 0.0, %v371
      %373 = vdwg.mxu0
      %v374 = vadd.f32 %v339, %v370
      %v375 = vadd.f32 %v341, %v372
      %s376 = scalar_lea.vmem %s2, 24
      %v377 = vld [vmem:[%s376] sm:$0xf]
      %v378 = vld [vmem:[%s376 + $0x4] sm:$0xf]
      %v379 = vshrl.u32 %v350, 16
      %v381 = vshll.u32 %v350, 16
      %v383 = vrot.slane %v381, 1
      %v384 = vor.u32 %v379, %v383
      %v387 = vunpack.c.l.b16 %v377
      %v388 = vunpack.c.l.b16 %v378
      %v389 = vpack.c.b16 %v388, %v387
      %v392 = vsel %vm303, %v384, 0
      %394 = vmatpush.bf16.msra.mxu0 0
      %395 = vmatpush.bf16.msra.mxu0 0
      %396 = vmatpush.bf16.msra.mxu0 0
      %397 = vmatpush.bf16.msra.mxu0 0
      %398 = vmatpush.bf16.msra.mxu0 0
      %399 = vmatpush.bf16.msra.mxu0 0
      %400 = vmatpush.bf16.msra.mxu0 0
      %401 = vmatpush.bf16.msra.mxu0 %v389
      %402 = vmatmul.bf16.gmra.mxu0 %v392
      %v403 = vpop.f32.mrf.mxu0
      %v404 = vadd.f32 0.0, %v403
      %v405 = vpop.f32.mrf.mxu0
      %v406 = vadd.f32 0.0, %v405
      %407 = vdwg.mxu0
      %v408 = vadd.f32 %v374, %v404
      %v409 = vadd.f32 %v375, %v406
      %v410 = vld [vmem:[%s3] sm:$0x1]
      %v412 = vperm.slane %v410, 0
      %v414 = vadd.f32 %v408, %v412
      %v415 = vadd.f32 %v409, %v412
      %v416 = vtanh.pop %v414
      %v417 = vtanh.pop %v415
      %418 = vst [vmem:[%s274] sm:$0xff] %v416
      %419 = vst [vmem:[%s274 + $0x8] sm:$0x1] %v417
      %p420 = scmp.lt.s32.totalorder %s19, 1
      %s421 = scalar_select %p420, %s19, 1
      %p422 = scmp.lt.s32.totalorder %s20, 8
      %s423 = scalar_select %p422, %s20, 8
      %s424 = smul.addr %s423, 2
      %s425 = smul.addr %s421, 18
      %s426 = sadd.s32 %s424, %s425
      %s427 = smul.addr %s426, 8
      %s428 = scalar_lea.vmem %s4, %s427
      // Predicated region
      $region37: #{generator_forward.9} parent=35 // pred_check
        %p429 = pneg %p147
      $region38: #{generator_forward.9} parent=35 // pred_check_branch
        %431 = sbr.rel (%p429) target = $region40
      $region39: #{generator_forward.9} parent=35 // pred_region
        _
      $region40: #{generator_forward.9} parent=35 // pred_fallthru
        _
    $region36: #{generator_forward.9} parent=5 // pred_fallthru
      _
    %p432 = scmp.le.s32.totalorder 2, %s10
    // Predicated region
    $region41: #{generator_forward.9} parent=5 // pred_check
      %p433 = pneg %p432
    $region42: #{generator_forward.9} parent=5 // pred_check_branch
      %435 = sbr.rel (%p433) target = $region44
    $region43: #{generator_forward.9} parent=5 // pred_region
      %s436 = ssub.s32 %s10, 2
      // Predicated region
      $region45: #{generator_forward.9} parent=43 // pred_check
        %p437 = pneg %p153
      $region46: #{generator_forward.9} parent=43 // pred_check_branch
        %439 = sbr.rel (%p437) target = $region48
      $region47: #{generator_forward.9} parent=43 // pred_region
        %p440 = scmp.lt.s32.totalorder %s21, 1
        %s441 = scalar_select %p440, %s21, 1
        %p442 = scmp.lt.s32.totalorder %s22, 8
        %s443 = scalar_select %p442, %s22, 8
        %s444 = smul.addr %s443, 2
        %s445 = smul.addr %s441, 18
        %s446 = sadd.s32 %s444, %s445
        %s447 = smul.addr %s446, 8
        %s448 = scalar_lea.vmem %s4, %s447
      $region48: #{generator_forward.9} parent=43 // pred_fallthru
        _
    $region44: #{generator_forward.9} parent=5 // pred_fallthru
      _
  $region6: #{generator_forward.9} parent=0 // loop_footer
    %s14 = sadd.s32 1, %s10
  $region7: #{generator_forward.9} parent=0 // loop_footer_branch
    %9 = sbr.rel target = $region3
  $region8: #{generator_forward.9} parent=0 // loop_exit
    _

</llo_original>
